<compile_context>
chip_gen: v5e
topology: v5e:2x2
jax: 0.10.0
libtpu: 0.0.40
codegen_flags: <defaults>
</compile_context>

<pallas_src>
import jax
import jax.numpy as jnp
from jax import lax
from jax.experimental import pallas as pl
from jax.experimental.pallas import tpu as pltpu


def tls_lstm_kernel(pre1_ref,                      # (T, B, 4H) f32: x@W_ih1 + b1
                    whh1_ref, wih2_ref, whh2_ref,  # (H, 4H) bf16 each
                    b2_ref,                        # (1, 4H) f32
                    wfc_ref, bfc_ref,              # (H, O), (1, O) f32
                    out_ref):                      # (B, O) f32
    T, B, fourH = pre1_ref.shape
    H = fourH // 4

    # Hoisted weight loads / bias + lane-mask broadcasts (not re-issued per step).
    whh1 = whh1_ref[...]
    wih2 = wih2_ref[...]
    whh2 = whh2_ref[...]
    b2 = jnp.broadcast_to(b2_ref[...], (B, fourH)).astype(jnp.float32)

    # Per-gate lane mask (PyTorch gate order i, f, g, o): scale g-lanes by 2 so a
    # single sigmoid push covers all four gates (tanh(x) = 2*sigmoid(2x) - 1).
    lane = lax.broadcasted_iota(jnp.int32, (B, fourH), 1)
    gate_scale = jnp.where((lane >= 2 * H) & (lane < 3 * H),
                           jnp.float32(2.0), jnp.float32(1.0))

    def gates_to_hc(gates, c_prev):
        # ONE EUP push for the whole (B, 4H) gate tile.
        sig = jax.nn.sigmoid(gates * gate_scale)
        i = sig[:, 0 * H:1 * H]
        f = sig[:, 1 * H:2 * H]
        g = 2.0 * sig[:, 2 * H:3 * H] - 1.0       # tanh of the raw g gate
        o = sig[:, 3 * H:4 * H]
        c = f * c_prev + i * g
        h = o * jnp.tanh(c)                        # second (and last) EUP push
        return h, c

    zH = jnp.zeros((B, H), jnp.float32)
    z4H = jnp.zeros((B, fourH), jnp.float32)
    c1, c2, h2 = zH, zH, zH
    hh1 = z4H          # h1_{t-1} @ W_hh1 (zero initial state)
    hh2 = b2           # h2_{t-1} @ W_hh2 + b2 (zero initial state -> just b2)

    # Fully unrolled, skewed recurrence: each recurrent projection is issued the
    # moment its hidden state exists, off the next step's critical path.
    for t in range(T):
        g1 = hh1 + pre1_ref[t]                     # b1 already folded into pre1
        h1, c1 = gates_to_hc(g1, c1)
        if t + 1 < T:
            hh1 = jnp.dot(h1.astype(whh1.dtype), whh1,
                          preferred_element_type=jnp.float32)
        # dropout1: identity in eval mode
        g2 = jnp.dot(h1.astype(wih2.dtype), wih2,
                     preferred_element_type=jnp.float32) + hh2
        h2, c2 = gates_to_hc(g2, c2)
        if t + 1 < T:
            hh2 = jnp.dot(h2.astype(whh2.dtype), whh2,
                          preferred_element_type=jnp.float32) + b2
        # dropout2: identity in eval mode

    # fc applied to the last timestep's layer-2 hidden state.
    out_ref[...] = (jnp.dot(h2, wfc_ref[...], preferred_element_type=jnp.float32)
                    + bfc_ref[...])


def tls_lstm_forward(x, params, *, batch_block=None):
    """x: (B, T, I) float32 (batch_first, like PyTorch).  Returns (B, O)."""
    B, T, I = x.shape
    H = params["whh1"].shape[0]
    O = params["wfc"].shape[1]

    bb = B if batch_block is None else batch_block
    assert B % bb == 0, "batch_block must divide batch"
    # (8,128) sublane constraint on the (T, bb, 4H) block when the batch is split.
    assert bb == B or bb % 8 == 0, "batch_block must be a multiple of 8"

    # Layer-1 input projection + bias for ALL timesteps, off the recurrent chain.
    # For I == 1 this is just a broadcast multiply (no MXU outer product anywhere).
    x_tm = jnp.transpose(x, (1, 0, 2))                                  # (T, B, I)
    pre1 = jnp.einsum("tbi,ih->tbh", x_tm, params["wih1"]) + params["b1"]  # (T,B,4H)

    # Recurrent-path weights in bf16 (fp32 accumulation inside the kernel).
    whh1 = params["whh1"].astype(jnp.bfloat16)
    wih2 = params["wih2"].astype(jnp.bfloat16)
    whh2 = params["whh2"].astype(jnp.bfloat16)

    def rep(shape):  # replicated block (same tile for every grid step)
        return pl.BlockSpec(shape, lambda i: tuple(0 for _ in shape))

    out = pl.pallas_call(
        tls_lstm_kernel,
        out_shape=jax.ShapeDtypeStruct((B, O), jnp.float32),
        grid=(B // bb,),
        in_specs=[
            pl.BlockSpec((T, bb, 4 * H), lambda i: (0, i, 0)),
            rep((H, 4 * H)), rep((H, 4 * H)), rep((H, 4 * H)),
            rep((1, 4 * H)),
            rep((H, O)), rep((1, O)),
        ],
        out_specs=pl.BlockSpec((bb, O), lambda i: (i, 0)),
        compiler_params=pltpu.CompilerParams(
            dimension_semantics=("parallel",)),
    )(pre1, whh1, wih2, whh2, params["b2"], params["wfc"], params["bfc"])
    return out


def init_params(key, input_size=1, hidden_size=32, output_size=1):
    """Deterministic init mimicking PyTorch defaults (uniform(-1/sqrt(H), 1/sqrt(H)))."""
    ks = jax.random.split(key, 10)
    k = 1.0 / jnp.sqrt(jnp.float32(hidden_size))
    u = lambda kk, shape: jax.random.uniform(kk, shape, jnp.float32, -k, k)

    # LSTM weights stored transposed: (in_dim, 4H) / (H, 4H); bias = b_ih + b_hh.
    params = {
        "wih1": u(ks[0], (input_size, 4 * hidden_size)),
        "whh1": u(ks[1], (hidden_size, 4 * hidden_size)),
        "b1":   u(ks[2], (1, 4 * hidden_size)) + u(ks[3], (1, 4 * hidden_size)),
        "wih2": u(ks[4], (hidden_size, 4 * hidden_size)),
        "whh2": u(ks[5], (hidden_size, 4 * hidden_size)),
        "b2":   u(ks[6], (1, 4 * hidden_size)) + u(ks[7], (1, 4 * hidden_size)),
        "wfc":  jax.random.uniform(ks[8], (hidden_size, output_size),
                                   jnp.float32, -k, k),
        "bfc":  jax.random.uniform(ks[9], (1, output_size),
                                   jnp.float32, -k, k),
    }
    return params


def reference_forward(x, params):
    """Pure-JAX fp32 reference (lax.scan) with module semantics, for validation."""
    B, T, I = x.shape
    H = params["whh1"].shape[0]

    def cell(x_t, h, c, wih, whh, b):
        g = x_t @ wih + h @ whh + b
        i = jax.nn.sigmoid(g[:, 0 * H:1 * H])
        f = jax.nn.sigmoid(g[:, 1 * H:2 * H])
        gg = jnp.tanh(g[:, 2 * H:3 * H])
        o = jax.nn.sigmoid(g[:, 3 * H:4 * H])
        c = f * c + i * gg
        h = o * jnp.tanh(c)
        return h, c

    def step(carry, x_t):
        h1, c1, h2, c2 = carry
        h1, c1 = cell(x_t, h1, c1, params["wih1"], params["whh1"], params["b1"])
        h2, c2 = cell(h1, h2, c2, params["wih2"], params["whh2"], params["b2"])
        return (h1, c1, h2, c2), None

    z = jnp.zeros((B, H), jnp.float32)
    (h1, c1, h2, c2), _ = lax.scan(step, (z, z, z, z),
                                   jnp.transpose(x, (1, 0, 2)))
    return h2 @ params["wfc"] + params["bfc"]


if __name__ == "__main__":
    B, T, I, H, O = 8, 8, 1, 32, 1   # small shapes consistent with the module
    key = jax.random.PRNGKey(0)
    kx, kp = jax.random.split(key)
    x = jax.random.normal(kx, (B, T, I), jnp.float32)
    params = init_params(kp, input_size=I, hidden_size=H, output_size=O)

    out = jax.block_until_ready(tls_lstm_forward(x, params))

    ref = reference_forward(x, params)
    assert out.shape == (B, O)
    # bf16 matmul operands on the recurrent path -> loose-but-meaningful tolerance
    # against the fp32 reference.
    max_err = float(jnp.max(jnp.abs(out - ref)))
    assert max_err < 5e-2, f"mismatch vs JAX reference (max abs err {max_err})"

    print("KERNEL_OK")
</pallas_src>

<mosaic_0001>
module attributes {stable_mosaic.version = 11 : i64} {
  func.func @tls_lstm_kernel(%arg0: i32, %arg1: memref<8x8x128xf32, #tpu.memory_space<vmem>>, %arg2: memref<32x128xbf16, #tpu.memory_space<vmem>>, %arg3: memref<32x128xbf16, #tpu.memory_space<vmem>>, %arg4: memref<32x128xbf16, #tpu.memory_space<vmem>>, %arg5: memref<1x128xf32, #tpu.memory_space<vmem>>, %arg6: memref<32x1xf32, #tpu.memory_space<vmem>>, %arg7: memref<1x1xf32, #tpu.memory_space<vmem>>, %arg8: memref<8x1xf32, #tpu.memory_space<vmem>>) attributes {dimension_semantics = [#tpu.dimension_semantics<parallel>], iteration_bounds = array<i64: 1>, scalar_prefetch = 0 : i64, scratch_operands = 0 : i64, tpu.core_type = #tpu.core_type<tc>, window_params = [{transform_indices = @transform_0, window_bounds = array<i64: 8, 8, 128>}, {pipeline_mode = #tpu.pipeline_mode<synchronous>, transform_indices = @transform_1, window_bounds = array<i64: 32, 128>}, {pipeline_mode = #tpu.pipeline_mode<synchronous>, transform_indices = @transform_2, window_bounds = array<i64: 32, 128>}, {pipeline_mode = #tpu.pipeline_mode<synchronous>, transform_indices = @transform_3, window_bounds = array<i64: 32, 128>}, {pipeline_mode = #tpu.pipeline_mode<synchronous>, transform_indices = @transform_4, window_bounds = array<i64: 1, 128>}, {pipeline_mode = #tpu.pipeline_mode<synchronous>, transform_indices = @transform_5, window_bounds = array<i64: 32, 1>}, {pipeline_mode = #tpu.pipeline_mode<synchronous>, transform_indices = @transform_6, window_bounds = array<i64: 1, 1>}, {transform_indices = @transform_7, window_bounds = array<i64: 8, 1>}]} {
    %c0 = arith.constant 0 : index
    %c0_0 = arith.constant 0 : index
    %0 = vector.load %arg2[%c0, %c0_0] : memref<32x128xbf16, #tpu.memory_space<vmem>>, vector<32x128xbf16>
    %c0_1 = arith.constant 0 : index
    %c0_2 = arith.constant 0 : index
    %1 = vector.load %arg3[%c0_1, %c0_2] : memref<32x128xbf16, #tpu.memory_space<vmem>>, vector<32x128xbf16>
    %c0_3 = arith.constant 0 : index
    %c0_4 = arith.constant 0 : index
    %2 = vector.load %arg4[%c0_3, %c0_4] : memref<32x128xbf16, #tpu.memory_space<vmem>>, vector<32x128xbf16>
    %c0_5 = arith.constant 0 : index
    %c0_6 = arith.constant 0 : index
    %3 = vector.load %arg5[%c0_5, %c0_6] : memref<1x128xf32, #tpu.memory_space<vmem>>, vector<1x128xf32>
    %4 = vector.shape_cast %3 : vector<1x128xf32> to vector<1x128xf32>
    %5 = vector.broadcast %4 : vector<1x128xf32> to vector<8x128xf32>
    %6 = tpu.iota {dimensions = array<i32: 1>} : vector<8x128xi32>
    %c64_i32 = arith.constant 64 : i32
    %7 = vector.broadcast %c64_i32 : i32 to vector<8x128xi32>
    %8 = arith.cmpi sge, %6, %7 : vector<8x128xi32>
    %c96_i32 = arith.constant 96 : i32
    %9 = vector.broadcast %c96_i32 : i32 to vector<8x128xi32>
    %10 = arith.cmpi slt, %6, %9 : vector<8x128xi32>
    %11 = arith.andi %8, %10 : vector<8x128xi1>
    %cst = arith.constant 2.000000e+00 : f32
    %cst_7 = arith.constant 1.000000e+00 : f32
    %12 = vector.broadcast %cst : f32 to vector<8x128xf32>
    %13 = vector.broadcast %cst_7 : f32 to vector<8x128xf32>
    %14 = arith.select %11, %12, %13 : vector<8x128xi1>, vector<8x128xf32>
    %cst_8 = arith.constant 0.000000e+00 : f32
    %15 = vector.broadcast %cst_8 : f32 to vector<8x32xf32>
    %cst_9 = arith.constant 0.000000e+00 : f32
    %16 = vector.broadcast %cst_9 : f32 to vector<8x128xf32>
    %c0_10 = arith.constant 0 : index
    %c0_11 = arith.constant 0 : index
    %c0_12 = arith.constant 0 : index
    %17 = vector.load %arg1[%c0_10, %c0_11, %c0_12] : memref<8x8x128xf32, #tpu.memory_space<vmem>>, vector<1x8x128xf32>
    %18 = vector.shape_cast %17 : vector<1x8x128xf32> to vector<8x128xf32>
    %19 = arith.addf %16, %18 : vector<8x128xf32>
    %20 = arith.mulf %19, %14 : vector<8x128xf32>
    %21 = arith.negf %20 : vector<8x128xf32>
    %22 = math.exp %21 : vector<8x128xf32>
    %cst_13 = arith.constant 1.000000e+00 : f32
    %23 = vector.broadcast %cst_13 : f32 to vector<8x128xf32>
    %24 = arith.addf %23, %22 : vector<8x128xf32>
    %25 = arith.divf %23, %24 : vector<8x128xf32>
    %26 = vector.extract_strided_slice %25 {offsets = [0, 0], sizes = [8, 32], strides = [1, 1]} : vector<8x128xf32> to vector<8x32xf32>
    %27 = vector.extract_strided_slice %25 {offsets = [0, 32], sizes = [8, 32], strides = [1, 1]} : vector<8x128xf32> to vector<8x32xf32>
    %28 = vector.extract_strided_slice %25 {offsets = [0, 64], sizes = [8, 32], strides = [1, 1]} : vector<8x128xf32> to vector<8x32xf32>
    %cst_14 = arith.constant 2.000000e+00 : f32
    %29 = vector.broadcast %cst_14 : f32 to vector<8x32xf32>
    %30 = arith.mulf %29, %28 : vector<8x32xf32>
    %cst_15 = arith.constant 1.000000e+00 : f32
    %31 = vector.broadcast %cst_15 : f32 to vector<8x32xf32>
    %32 = arith.subf %30, %31 : vector<8x32xf32>
    %33 = vector.extract_strided_slice %25 {offsets = [0, 96], sizes = [8, 32], strides = [1, 1]} : vector<8x128xf32> to vector<8x32xf32>
    %34 = arith.mulf %27, %15 : vector<8x32xf32>
    %35 = arith.mulf %26, %32 : vector<8x32xf32>
    %36 = arith.addf %34, %35 : vector<8x32xf32>
    %37 = math.tanh %36 : vector<8x32xf32>
    %38 = arith.mulf %33, %37 : vector<8x32xf32>
    %39 = arith.truncf %38 : vector<8x32xf32> to vector<8x32xbf16>
    %cst_16 = arith.constant dense<0.000000e+00> : vector<8x128xf32>
    %40 = tpu.matmul %39, %0, %cst_16 {dimension_numbers = #tpu.dot_dimension_numbers<[1], [0], [0], [1], [0, 0, 1, 1], [], []>} : vector<8x32xbf16>, vector<32x128xbf16>, vector<8x128xf32> -> vector<8x128xf32>
    %41 = arith.truncf %38 : vector<8x32xf32> to vector<8x32xbf16>
    %cst_17 = arith.constant dense<0.000000e+00> : vector<8x128xf32>
    %42 = tpu.matmul %41, %1, %cst_17 {dimension_numbers = #tpu.dot_dimension_numbers<[1], [0], [0], [1], [0, 0, 1, 1], [], []>} : vector<8x32xbf16>, vector<32x128xbf16>, vector<8x128xf32> -> vector<8x128xf32>
    %43 = arith.addf %42, %5 : vector<8x128xf32>
    %44 = arith.mulf %43, %14 : vector<8x128xf32>
    %45 = arith.negf %44 : vector<8x128xf32>
    %46 = math.exp %45 : vector<8x128xf32>
    %cst_18 = arith.constant 1.000000e+00 : f32
    %47 = vector.broadcast %cst_18 : f32 to vector<8x128xf32>
    %48 = arith.addf %47, %46 : vector<8x128xf32>
    %49 = arith.divf %47, %48 : vector<8x128xf32>
    %50 = vector.extract_strided_slice %49 {offsets = [0, 0], sizes = [8, 32], strides = [1, 1]} : vector<8x128xf32> to vector<8x32xf32>
    %51 = vector.extract_strided_slice %49 {offsets = [0, 32], sizes = [8, 32], strides = [1, 1]} : vector<8x128xf32> to vector<8x32xf32>
    %52 = vector.extract_strided_slice %49 {offsets = [0, 64], sizes = [8, 32], strides = [1, 1]} : vector<8x128xf32> to vector<8x32xf32>
    %cst_19 = arith.constant 2.000000e+00 : f32
    %53 = vector.broadcast %cst_19 : f32 to vector<8x32xf32>
    %54 = arith.mulf %53, %52 : vector<8x32xf32>
    %cst_20 = arith.constant 1.000000e+00 : f32
    %55 = vector.broadcast %cst_20 : f32 to vector<8x32xf32>
    %56 = arith.subf %54, %55 : vector<8x32xf32>
    %57 = vector.extract_strided_slice %49 {offsets = [0, 96], sizes = [8, 32], strides = [1, 1]} : vector<8x128xf32> to vector<8x32xf32>
    %58 = arith.mulf %51, %15 : vector<8x32xf32>
    %59 = arith.mulf %50, %56 : vector<8x32xf32>
    %60 = arith.addf %58, %59 : vector<8x32xf32>
    %61 = math.tanh %60 : vector<8x32xf32>
    %62 = arith.mulf %57, %61 : vector<8x32xf32>
    %63 = arith.truncf %62 : vector<8x32xf32> to vector<8x32xbf16>
    %cst_21 = arith.constant dense<0.000000e+00> : vector<8x128xf32>
    %64 = tpu.matmul %63, %2, %cst_21 {dimension_numbers = #tpu.dot_dimension_numbers<[1], [0], [0], [1], [0, 0, 1, 1], [], []>} : vector<8x32xbf16>, vector<32x128xbf16>, vector<8x128xf32> -> vector<8x128xf32>
    %65 = arith.addf %64, %5 : vector<8x128xf32>
    %c1 = arith.constant 1 : index
    %c0_22 = arith.constant 0 : index
    %c0_23 = arith.constant 0 : index
    %66 = vector.load %arg1[%c1, %c0_22, %c0_23] : memref<8x8x128xf32, #tpu.memory_space<vmem>>, vector<1x8x128xf32>
    %67 = vector.shape_cast %66 : vector<1x8x128xf32> to vector<8x128xf32>
    %68 = arith.addf %40, %67 : vector<8x128xf32>
    %69 = arith.mulf %68, %14 : vector<8x128xf32>
    %70 = arith.negf %69 : vector<8x128xf32>
    %71 = math.exp %70 : vector<8x128xf32>
    %cst_24 = arith.constant 1.000000e+00 : f32
    %72 = vector.broadcast %cst_24 : f32 to vector<8x128xf32>
    %73 = arith.addf %72, %71 : vector<8x128xf32>
    %74 = arith.divf %72, %73 : vector<8x128xf32>
    %75 = vector.extract_strided_slice %74 {offsets = [0, 0], sizes = [8, 32], strides = [1, 1]} : vector<8x128xf32> to vector<8x32xf32>
    %76 = vector.extract_strided_slice %74 {offsets = [0, 32], sizes = [8, 32], strides = [1, 1]} : vector<8x128xf32> to vector<8x32xf32>
    %77 = vector.extract_strided_slice %74 {offsets = [0, 64], sizes = [8, 32], strides = [1, 1]} : vector<8x128xf32> to vector<8x32xf32>
    %cst_25 = arith.constant 2.000000e+00 : f32
    %78 = vector.broadcast %cst_25 : f32 to vector<8x32xf32>
    %79 = arith.mulf %78, %77 : vector<8x32xf32>
    %cst_26 = arith.constant 1.000000e+00 : f32
    %80 = vector.broadcast %cst_26 : f32 to vector<8x32xf32>
    %81 = arith.subf %79, %80 : vector<8x32xf32>
    %82 = vector.extract_strided_slice %74 {offsets = [0, 96], sizes = [8, 32], strides = [1, 1]} : vector<8x128xf32> to vector<8x32xf32>
    %83 = arith.mulf %76, %36 : vector<8x32xf32>
    %84 = arith.mulf %75, %81 : vector<8x32xf32>
    %85 = arith.addf %83, %84 : vector<8x32xf32>
    %86 = math.tanh %85 : vector<8x32xf32>
    %87 = arith.mulf %82, %86 : vector<8x32xf32>
    %88 = arith.truncf %87 : vector<8x32xf32> to vector<8x32xbf16>
    %cst_27 = arith.constant dense<0.000000e+00> : vector<8x128xf32>
    %89 = tpu.matmul %88, %0, %cst_27 {dimension_numbers = #tpu.dot_dimension_numbers<[1], [0], [0], [1], [0, 0, 1, 1], [], []>} : vector<8x32xbf16>, vector<32x128xbf16>, vector<8x128xf32> -> vector<8x128xf32>
    %90 = arith.truncf %87 : vector<8x32xf32> to vector<8x32xbf16>
    %cst_28 = arith.constant dense<0.000000e+00> : vector<8x128xf32>
    %91 = tpu.matmul %90, %1, %cst_28 {dimension_numbers = #tpu.dot_dimension_numbers<[1], [0], [0], [1], [0, 0, 1, 1], [], []>} : vector<8x32xbf16>, vector<32x128xbf16>, vector<8x128xf32> -> vector<8x128xf32>
    %92 = arith.addf %91, %65 : vector<8x128xf32>
    %93 = arith.mulf %92, %14 : vector<8x128xf32>
    %94 = arith.negf %93 : vector<8x128xf32>
    %95 = math.exp %94 : vector<8x128xf32>
    %cst_29 = arith.constant 1.000000e+00 : f32
    %96 = vector.broadcast %cst_29 : f32 to vector<8x128xf32>
    %97 = arith.addf %96, %95 : vector<8x128xf32>
    %98 = arith.divf %96, %97 : vector<8x128xf32>
    %99 = vector.extract_strided_slice %98 {offsets = [0, 0], sizes = [8, 32], strides = [1, 1]} : vector<8x128xf32> to vector<8x32xf32>
    %100 = vector.extract_strided_slice %98 {offsets = [0, 32], sizes = [8, 32], strides = [1, 1]} : vector<8x128xf32> to vector<8x32xf32>
    %101 = vector.extract_strided_slice %98 {offsets = [0, 64], sizes = [8, 32], strides = [1, 1]} : vector<8x128xf32> to vector<8x32xf32>
    %cst_30 = arith.constant 2.000000e+00 : f32
    %102 = vector.broadcast %cst_30 : f32 to vector<8x32xf32>
    %103 = arith.mulf %102, %101 : vector<8x32xf32>
    %cst_31 = arith.constant 1.000000e+00 : f32
    %104 = vector.broadcast %cst_31 : f32 to vector<8x32xf32>
    %105 = arith.subf %103, %104 : vector<8x32xf32>
    %106 = vector.extract_strided_slice %98 {offsets = [0, 96], sizes = [8, 32], strides = [1, 1]} : vector<8x128xf32> to vector<8x32xf32>
    %107 = arith.mulf %100, %60 : vector<8x32xf32>
    %108 = arith.mulf %99, %105 : vector<8x32xf32>
    %109 = arith.addf %107, %108 : vector<8x32xf32>
    %110 = math.tanh %109 : vector<8x32xf32>
    %111 = arith.mulf %106, %110 : vector<8x32xf32>
    %112 = arith.truncf %111 : vector<8x32xf32> to vector<8x32xbf16>
    %cst_32 = arith.constant dense<0.000000e+00> : vector<8x128xf32>
    %113 = tpu.matmul %112, %2, %cst_32 {dimension_numbers = #tpu.dot_dimension_numbers<[1], [0], [0], [1], [0, 0, 1, 1], [], []>} : vector<8x32xbf16>, vector<32x128xbf16>, vector<8x128xf32> -> vector<8x128xf32>
    %114 = arith.addf %113, %5 : vector<8x128xf32>
    %c2 = arith.constant 2 : index
    %c0_33 = arith.constant 0 : index
    %c0_34 = arith.constant 0 : index
    %115 = vector.load %arg1[%c2, %c0_33, %c0_34] : memref<8x8x128xf32, #tpu.memory_space<vmem>>, vector<1x8x128xf32>
    %116 = vector.shape_cast %115 : vector<1x8x128xf32> to vector<8x128xf32>
    %117 = arith.addf %89, %116 : vector<8x128xf32>
    %118 = arith.mulf %117, %14 : vector<8x128xf32>
    %119 = arith.negf %118 : vector<8x128xf32>
    %120 = math.exp %119 : vector<8x128xf32>
    %cst_35 = arith.constant 1.000000e+00 : f32
    %121 = vector.broadcast %cst_35 : f32 to vector<8x128xf32>
    %122 = arith.addf %121, %120 : vector<8x128xf32>
    %123 = arith.divf %121, %122 : vector<8x128xf32>
    %124 = vector.extract_strided_slice %123 {offsets = [0, 0], sizes = [8, 32], strides = [1, 1]} : vector<8x128xf32> to vector<8x32xf32>
    %125 = vector.extract_strided_slice %123 {offsets = [0, 32], sizes = [8, 32], strides = [1, 1]} : vector<8x128xf32> to vector<8x32xf32>
    %126 = vector.extract_strided_slice %123 {offsets = [0, 64], sizes = [8, 32], strides = [1, 1]} : vector<8x128xf32> to vector<8x32xf32>
    %cst_36 = arith.constant 2.000000e+00 : f32
    %127 = vector.broadcast %cst_36 : f32 to vector<8x32xf32>
    %128 = arith.mulf %127, %126 : vector<8x32xf32>
    %cst_37 = arith.constant 1.000000e+00 : f32
    %129 = vector.broadcast %cst_37 : f32 to vector<8x32xf32>
    %130 = arith.subf %128, %129 : vector<8x32xf32>
    %131 = vector.extract_strided_slice %123 {offsets = [0, 96], sizes = [8, 32], strides = [1, 1]} : vector<8x128xf32> to vector<8x32xf32>
    %132 = arith.mulf %125, %85 : vector<8x32xf32>
    %133 = arith.mulf %124, %130 : vector<8x32xf32>
    %134 = arith.addf %132, %133 : vector<8x32xf32>
    %135 = math.tanh %134 : vector<8x32xf32>
    %136 = arith.mulf %131, %135 : vector<8x32xf32>
    %137 = arith.truncf %136 : vector<8x32xf32> to vector<8x32xbf16>
    %cst_38 = arith.constant dense<0.000000e+00> : vector<8x128xf32>
    %138 = tpu.matmul %137, %0, %cst_38 {dimension_numbers = #tpu.dot_dimension_numbers<[1], [0], [0], [1], [0, 0, 1, 1], [], []>} : vector<8x32xbf16>, vector<32x128xbf16>, vector<8x128xf32> -> vector<8x128xf32>
    %139 = arith.truncf %136 : vector<8x32xf32> to vector<8x32xbf16>
    %cst_39 = arith.constant dense<0.000000e+00> : vector<8x128xf32>
    %140 = tpu.matmul %139, %1, %cst_39 {dimension_numbers = #tpu.dot_dimension_numbers<[1], [0], [0], [1], [0, 0, 1, 1], [], []>} : vector<8x32xbf16>, vector<32x128xbf16>, vector<8x128xf32> -> vector<8x128xf32>
    %141 = arith.addf %140, %114 : vector<8x128xf32>
    %142 = arith.mulf %141, %14 : vector<8x128xf32>
    %143 = arith.negf %142 : vector<8x128xf32>
    %144 = math.exp %143 : vector<8x128xf32>
    %cst_40 = arith.constant 1.000000e+00 : f32
    %145 = vector.broadcast %cst_40 : f32 to vector<8x128xf32>
    %146 = arith.addf %145, %144 : vector<8x128xf32>
    %147 = arith.divf %145, %146 : vector<8x128xf32>
    %148 = vector.extract_strided_slice %147 {offsets = [0, 0], sizes = [8, 32], strides = [1, 1]} : vector<8x128xf32> to vector<8x32xf32>
    %149 = vector.extract_strided_slice %147 {offsets = [0, 32], sizes = [8, 32], strides = [1, 1]} : vector<8x128xf32> to vector<8x32xf32>
    %150 = vector.extract_strided_slice %147 {offsets = [0, 64], sizes = [8, 32], strides = [1, 1]} : vector<8x128xf32> to vector<8x32xf32>
    %cst_41 = arith.constant 2.000000e+00 : f32
    %151 = vector.broadcast %cst_41 : f32 to vector<8x32xf32>
    %152 = arith.mulf %151, %150 : vector<8x32xf32>
    %cst_42 = arith.constant 1.000000e+00 : f32
    %153 = vector.broadcast %cst_42 : f32 to vector<8x32xf32>
    %154 = arith.subf %152, %153 : vector<8x32xf32>
    %155 = vector.extract_strided_slice %147 {offsets = [0, 96], sizes = [8, 32], strides = [1, 1]} : vector<8x128xf32> to vector<8x32xf32>
    %156 = arith.mulf %149, %109 : vector<8x32xf32>
    %157 = arith.mulf %148, %154 : vector<8x32xf32>
    %158 = arith.addf %156, %157 : vector<8x32xf32>
    %159 = math.tanh %158 : vector<8x32xf32>
    %160 = arith.mulf %155, %159 : vector<8x32xf32>
    %161 = arith.truncf %160 : vector<8x32xf32> to vector<8x32xbf16>
    %cst_43 = arith.constant dense<0.000000e+00> : vector<8x128xf32>
    %162 = tpu.matmul %161, %2, %cst_43 {dimension_numbers = #tpu.dot_dimension_numbers<[1], [0], [0], [1], [0, 0, 1, 1], [], []>} : vector<8x32xbf16>, vector<32x128xbf16>, vector<8x128xf32> -> vector<8x128xf32>
    %163 = arith.addf %162, %5 : vector<8x128xf32>
    %c3 = arith.constant 3 : index
    %c0_44 = arith.constant 0 : index
    %c0_45 = arith.constant 0 : index
    %164 = vector.load %arg1[%c3, %c0_44, %c0_45] : memref<8x8x128xf32, #tpu.memory_space<vmem>>, vector<1x8x128xf32>
    %165 = vector.shape_cast %164 : vector<1x8x128xf32> to vector<8x128xf32>
    %166 = arith.addf %138, %165 : vector<8x128xf32>
    %167 = arith.mulf %166, %14 : vector<8x128xf32>
    %168 = arith.negf %167 : vector<8x128xf32>
    %169 = math.exp %168 : vector<8x128xf32>
    %cst_46 = arith.constant 1.000000e+00 : f32
    %170 = vector.broadcast %cst_46 : f32 to vector<8x128xf32>
    %171 = arith.addf %170, %169 : vector<8x128xf32>
    %172 = arith.divf %170, %171 : vector<8x128xf32>
    %173 = vector.extract_strided_slice %172 {offsets = [0, 0], sizes = [8, 32], strides = [1, 1]} : vector<8x128xf32> to vector<8x32xf32>
    %174 = vector.extract_strided_slice %172 {offsets = [0, 32], sizes = [8, 32], strides = [1, 1]} : vector<8x128xf32> to vector<8x32xf32>
    %175 = vector.extract_strided_slice %172 {offsets = [0, 64], sizes = [8, 32], strides = [1, 1]} : vector<8x128xf32> to vector<8x32xf32>
    %cst_47 = arith.constant 2.000000e+00 : f32
    %176 = vector.broadcast %cst_47 : f32 to vector<8x32xf32>
    %177 = arith.mulf %176, %175 : vector<8x32xf32>
    %cst_48 = arith.constant 1.000000e+00 : f32
    %178 = vector.broadcast %cst_48 : f32 to vector<8x32xf32>
    %179 = arith.subf %177, %178 : vector<8x32xf32>
    %180 = vector.extract_strided_slice %172 {offsets = [0, 96], sizes = [8, 32], strides = [1, 1]} : vector<8x128xf32> to vector<8x32xf32>
    %181 = arith.mulf %174, %134 : vector<8x32xf32>
    %182 = arith.mulf %173, %179 : vector<8x32xf32>
    %183 = arith.addf %181, %182 : vector<8x32xf32>
    %184 = math.tanh %183 : vector<8x32xf32>
    %185 = arith.mulf %180, %184 : vector<8x32xf32>
    %186 = arith.truncf %185 : vector<8x32xf32> to vector<8x32xbf16>
    %cst_49 = arith.constant dense<0.000000e+00> : vector<8x128xf32>
    %187 = tpu.matmul %186, %0, %cst_49 {dimension_numbers = #tpu.dot_dimension_numbers<[1], [0], [0], [1], [0, 0, 1, 1], [], []>} : vector<8x32xbf16>, vector<32x128xbf16>, vector<8x128xf32> -> vector<8x128xf32>
    %188 = arith.truncf %185 : vector<8x32xf32> to vector<8x32xbf16>
    %cst_50 = arith.constant dense<0.000000e+00> : vector<8x128xf32>
    %189 = tpu.matmul %188, %1, %cst_50 {dimension_numbers = #tpu.dot_dimension_numbers<[1], [0], [0], [1], [0, 0, 1, 1], [], []>} : vector<8x32xbf16>, vector<32x128xbf16>, vector<8x128xf32> -> vector<8x128xf32>
    %190 = arith.addf %189, %163 : vector<8x128xf32>
    %191 = arith.mulf %190, %14 : vector<8x128xf32>
    %192 = arith.negf %191 : vector<8x128xf32>
    %193 = math.exp %192 : vector<8x128xf32>
    %cst_51 = arith.constant 1.000000e+00 : f32
    %194 = vector.broadcast %cst_51 : f32 to vector<8x128xf32>
    %195 = arith.addf %194, %193 : vector<8x128xf32>
    %196 = arith.divf %194, %195 : vector<8x128xf32>
    %197 = vector.extract_strided_slice %196 {offsets = [0, 0], sizes = [8, 32], strides = [1, 1]} : vector<8x128xf32> to vector<8x32xf32>
    %198 = vector.extract_strided_slice %196 {offsets = [0, 32], sizes = [8, 32], strides = [1, 1]} : vector<8x128xf32> to vector<8x32xf32>
    %199 = vector.extract_strided_slice %196 {offsets = [0, 64], sizes = [8, 32], strides = [1, 1]} : vector<8x128xf32> to vector<8x32xf32>
    %cst_52 = arith.constant 2.000000e+00 : f32
    %200 = vector.broadcast %cst_52 : f32 to vector<8x32xf32>
    %201 = arith.mulf %200, %199 : vector<8x32xf32>
    %cst_53 = arith.constant 1.000000e+00 : f32
    %202 = vector.broadcast %cst_53 : f32 to vector<8x32xf32>
    %203 = arith.subf %201, %202 : vector<8x32xf32>
    %204 = vector.extract_strided_slice %196 {offsets = [0, 96], sizes = [8, 32], strides = [1, 1]} : vector<8x128xf32> to vector<8x32xf32>
    %205 = arith.mulf %198, %158 : vector<8x32xf32>
    %206 = arith.mulf %197, %203 : vector<8x32xf32>
    %207 = arith.addf %205, %206 : vector<8x32xf32>
    %208 = math.tanh %207 : vector<8x32xf32>
    %209 = arith.mulf %204, %208 : vector<8x32xf32>
    %210 = arith.truncf %209 : vector<8x32xf32> to vector<8x32xbf16>
    %cst_54 = arith.constant dense<0.000000e+00> : vector<8x128xf32>
    %211 = tpu.matmul %210, %2, %cst_54 {dimension_numbers = #tpu.dot_dimension_numbers<[1], [0], [0], [1], [0, 0, 1, 1], [], []>} : vector<8x32xbf16>, vector<32x128xbf16>, vector<8x128xf32> -> vector<8x128xf32>
    %212 = arith.addf %211, %5 : vector<8x128xf32>
    %c4 = arith.constant 4 : index
    %c0_55 = arith.constant 0 : index
    %c0_56 = arith.constant 0 : index
    %213 = vector.load %arg1[%c4, %c0_55, %c0_56] : memref<8x8x128xf32, #tpu.memory_space<vmem>>, vector<1x8x128xf32>
    %214 = vector.shape_cast %213 : vector<1x8x128xf32> to vector<8x128xf32>
    %215 = arith.addf %187, %214 : vector<8x128xf32>
    %216 = arith.mulf %215, %14 : vector<8x128xf32>
    %217 = arith.negf %216 : vector<8x128xf32>
    %218 = math.exp %217 : vector<8x128xf32>
    %cst_57 = arith.constant 1.000000e+00 : f32
    %219 = vector.broadcast %cst_57 : f32 to vector<8x128xf32>
    %220 = arith.addf %219, %218 : vector<8x128xf32>
    %221 = arith.divf %219, %220 : vector<8x128xf32>
    %222 = vector.extract_strided_slice %221 {offsets = [0, 0], sizes = [8, 32], strides = [1, 1]} : vector<8x128xf32> to vector<8x32xf32>
    %223 = vector.extract_strided_slice %221 {offsets = [0, 32], sizes = [8, 32], strides = [1, 1]} : vector<8x128xf32> to vector<8x32xf32>
    %224 = vector.extract_strided_slice %221 {offsets = [0, 64], sizes = [8, 32], strides = [1, 1]} : vector<8x128xf32> to vector<8x32xf32>
    %cst_58 = arith.constant 2.000000e+00 : f32
    %225 = vector.broadcast %cst_58 : f32 to vector<8x32xf32>
    %226 = arith.mulf %225, %224 : vector<8x32xf32>
    %cst_59 = arith.constant 1.000000e+00 : f32
    %227 = vector.broadcast %cst_59 : f32 to vector<8x32xf32>
    %228 = arith.subf %226, %227 : vector<8x32xf32>
    %229 = vector.extract_strided_slice %221 {offsets = [0, 96], sizes = [8, 32], strides = [1, 1]} : vector<8x128xf32> to vector<8x32xf32>
    %230 = arith.mulf %223, %183 : vector<8x32xf32>
    %231 = arith.mulf %222, %228 : vector<8x32xf32>
    %232 = arith.addf %230, %231 : vector<8x32xf32>
    %233 = math.tanh %232 : vector<8x32xf32>
    %234 = arith.mulf %229, %233 : vector<8x32xf32>
    %235 = arith.truncf %234 : vector<8x32xf32> to vector<8x32xbf16>
    %cst_60 = arith.constant dense<0.000000e+00> : vector<8x128xf32>
    %236 = tpu.matmul %235, %0, %cst_60 {dimension_numbers = #tpu.dot_dimension_numbers<[1], [0], [0], [1], [0, 0, 1, 1], [], []>} : vector<8x32xbf16>, vector<32x128xbf16>, vector<8x128xf32> -> vector<8x128xf32>
    %237 = arith.truncf %234 : vector<8x32xf32> to vector<8x32xbf16>
    %cst_61 = arith.constant dense<0.000000e+00> : vector<8x128xf32>
    %238 = tpu.matmul %237, %1, %cst_61 {dimension_numbers = #tpu.dot_dimension_numbers<[1], [0], [0], [1], [0, 0, 1, 1], [], []>} : vector<8x32xbf16>, vector<32x128xbf16>, vector<8x128xf32> -> vector<8x128xf32>
    %239 = arith.addf %238, %212 : vector<8x128xf32>
    %240 = arith.mulf %239, %14 : vector<8x128xf32>
    %241 = arith.negf %240 : vector<8x128xf32>
    %242 = math.exp %241 : vector<8x128xf32>
    %cst_62 = arith.constant 1.000000e+00 : f32
    %243 = vector.broadcast %cst_62 : f32 to vector<8x128xf32>
    %244 = arith.addf %243, %242 : vector<8x128xf32>
    %245 = arith.divf %243, %244 : vector<8x128xf32>
    %246 = vector.extract_strided_slice %245 {offsets = [0, 0], sizes = [8, 32], strides = [1, 1]} : vector<8x128xf32> to vector<8x32xf32>
    %247 = vector.extract_strided_slice %245 {offsets = [0, 32], sizes = [8, 32], strides = [1, 1]} : vector<8x128xf32> to vector<8x32xf32>
    %248 = vector.extract_strided_slice %245 {offsets = [0, 64], sizes = [8, 32], strides = [1, 1]} : vector<8x128xf32> to vector<8x32xf32>
    %cst_63 = arith.constant 2.000000e+00 : f32
    %249 = vector.broadcast %cst_63 : f32 to vector<8x32xf32>
    %250 = arith.mulf %249, %248 : vector<8x32xf32>
    %cst_64 = arith.constant 1.000000e+00 : f32
    %251 = vector.broadcast %cst_64 : f32 to vector<8x32xf32>
    %252 = arith.subf %250, %251 : vector<8x32xf32>
    %253 = vector.extract_strided_slice %245 {offsets = [0, 96], sizes = [8, 32], strides = [1, 1]} : vector<8x128xf32> to vector<8x32xf32>
    %254 = arith.mulf %247, %207 : vector<8x32xf32>
    %255 = arith.mulf %246, %252 : vector<8x32xf32>
    %256 = arith.addf %254, %255 : vector<8x32xf32>
    %257 = math.tanh %256 : vector<8x32xf32>
    %258 = arith.mulf %253, %257 : vector<8x32xf32>
    %259 = arith.truncf %258 : vector<8x32xf32> to vector<8x32xbf16>
    %cst_65 = arith.constant dense<0.000000e+00> : vector<8x128xf32>
    %260 = tpu.matmul %259, %2, %cst_65 {dimension_numbers = #tpu.dot_dimension_numbers<[1], [0], [0], [1], [0, 0, 1, 1], [], []>} : vector<8x32xbf16>, vector<32x128xbf16>, vector<8x128xf32> -> vector<8x128xf32>
    %261 = arith.addf %260, %5 : vector<8x128xf32>
    %c5 = arith.constant 5 : index
    %c0_66 = arith.constant 0 : index
    %c0_67 = arith.constant 0 : index
    %262 = vector.load %arg1[%c5, %c0_66, %c0_67] : memref<8x8x128xf32, #tpu.memory_space<vmem>>, vector<1x8x128xf32>
    %263 = vector.shape_cast %262 : vector<1x8x128xf32> to vector<8x128xf32>
    %264 = arith.addf %236, %263 : vector<8x128xf32>
    %265 = arith.mulf %264, %14 : vector<8x128xf32>
    %266 = arith.negf %265 : vector<8x128xf32>
    %267 = math.exp %266 : vector<8x128xf32>
    %cst_68 = arith.constant 1.000000e+00 : f32
    %268 = vector.broadcast %cst_68 : f32 to vector<8x128xf32>
    %269 = arith.addf %268, %267 : vector<8x128xf32>
    %270 = arith.divf %268, %269 : vector<8x128xf32>
    %271 = vector.extract_strided_slice %270 {offsets = [0, 0], sizes = [8, 32], strides = [1, 1]} : vector<8x128xf32> to vector<8x32xf32>
    %272 = vector.extract_strided_slice %270 {offsets = [0, 32], sizes = [8, 32], strides = [1, 1]} : vector<8x128xf32> to vector<8x32xf32>
    %273 = vector.extract_strided_slice %270 {offsets = [0, 64], sizes = [8, 32], strides = [1, 1]} : vector<8x128xf32> to vector<8x32xf32>
    %cst_69 = arith.constant 2.000000e+00 : f32
    %274 = vector.broadcast %cst_69 : f32 to vector<8x32xf32>
    %275 = arith.mulf %274, %273 : vector<8x32xf32>
    %cst_70 = arith.constant 1.000000e+00 : f32
    %276 = vector.broadcast %cst_70 : f32 to vector<8x32xf32>
    %277 = arith.subf %275, %276 : vector<8x32xf32>
    %278 = vector.extract_strided_slice %270 {offsets = [0, 96], sizes = [8, 32], strides = [1, 1]} : vector<8x128xf32> to vector<8x32xf32>
    %279 = arith.mulf %272, %232 : vector<8x32xf32>
    %280 = arith.mulf %271, %277 : vector<8x32xf32>
    %281 = arith.addf %279, %280 : vector<8x32xf32>
    %282 = math.tanh %281 : vector<8x32xf32>
    %283 = arith.mulf %278, %282 : vector<8x32xf32>
    %284 = arith.truncf %283 : vector<8x32xf32> to vector<8x32xbf16>
    %cst_71 = arith.constant dense<0.000000e+00> : vector<8x128xf32>
    %285 = tpu.matmul %284, %0, %cst_71 {dimension_numbers = #tpu.dot_dimension_numbers<[1], [0], [0], [1], [0, 0, 1, 1], [], []>} : vector<8x32xbf16>, vector<32x128xbf16>, vector<8x128xf32> -> vector<8x128xf32>
    %286 = arith.truncf %283 : vector<8x32xf32> to vector<8x32xbf16>
    %cst_72 = arith.constant dense<0.000000e+00> : vector<8x128xf32>
    %287 = tpu.matmul %286, %1, %cst_72 {dimension_numbers = #tpu.dot_dimension_numbers<[1], [0], [0], [1], [0, 0, 1, 1], [], []>} : vector<8x32xbf16>, vector<32x128xbf16>, vector<8x128xf32> -> vector<8x128xf32>
    %288 = arith.addf %287, %261 : vector<8x128xf32>
    %289 = arith.mulf %288, %14 : vector<8x128xf32>
    %290 = arith.negf %289 : vector<8x128xf32>
    %291 = math.exp %290 : vector<8x128xf32>
    %cst_73 = arith.constant 1.000000e+00 : f32
    %292 = vector.broadcast %cst_73 : f32 to vector<8x128xf32>
    %293 = arith.addf %292, %291 : vector<8x128xf32>
    %294 = arith.divf %292, %293 : vector<8x128xf32>
    %295 = vector.extract_strided_slice %294 {offsets = [0, 0], sizes = [8, 32], strides = [1, 1]} : vector<8x128xf32> to vector<8x32xf32>
    %296 = vector.extract_strided_slice %294 {offsets = [0, 32], sizes = [8, 32], strides = [1, 1]} : vector<8x128xf32> to vector<8x32xf32>
    %297 = vector.extract_strided_slice %294 {offsets = [0, 64], sizes = [8, 32], strides = [1, 1]} : vector<8x128xf32> to vector<8x32xf32>
    %cst_74 = arith.constant 2.000000e+00 : f32
    %298 = vector.broadcast %cst_74 : f32 to vector<8x32xf32>
    %299 = arith.mulf %298, %297 : vector<8x32xf32>
    %cst_75 = arith.constant 1.000000e+00 : f32
    %300 = vector.broadcast %cst_75 : f32 to vector<8x32xf32>
    %301 = arith.subf %299, %300 : vector<8x32xf32>
    %302 = vector.extract_strided_slice %294 {offsets = [0, 96], sizes = [8, 32], strides = [1, 1]} : vector<8x128xf32> to vector<8x32xf32>
    %303 = arith.mulf %296, %256 : vector<8x32xf32>
    %304 = arith.mulf %295, %301 : vector<8x32xf32>
    %305 = arith.addf %303, %304 : vector<8x32xf32>
    %306 = math.tanh %305 : vector<8x32xf32>
    %307 = arith.mulf %302, %306 : vector<8x32xf32>
    %308 = arith.truncf %307 : vector<8x32xf32> to vector<8x32xbf16>
    %cst_76 = arith.constant dense<0.000000e+00> : vector<8x128xf32>
    %309 = tpu.matmul %308, %2, %cst_76 {dimension_numbers = #tpu.dot_dimension_numbers<[1], [0], [0], [1], [0, 0, 1, 1], [], []>} : vector<8x32xbf16>, vector<32x128xbf16>, vector<8x128xf32> -> vector<8x128xf32>
    %310 = arith.addf %309, %5 : vector<8x128xf32>
    %c6 = arith.constant 6 : index
    %c0_77 = arith.constant 0 : index
    %c0_78 = arith.constant 0 : index
    %311 = vector.load %arg1[%c6, %c0_77, %c0_78] : memref<8x8x128xf32, #tpu.memory_space<vmem>>, vector<1x8x128xf32>
    %312 = vector.shape_cast %311 : vector<1x8x128xf32> to vector<8x128xf32>
    %313 = arith.addf %285, %312 : vector<8x128xf32>
    %314 = arith.mulf %313, %14 : vector<8x128xf32>
    %315 = arith.negf %314 : vector<8x128xf32>
    %316 = math.exp %315 : vector<8x128xf32>
    %cst_79 = arith.constant 1.000000e+00 : f32
    %317 = vector.broadcast %cst_79 : f32 to vector<8x128xf32>
    %318 = arith.addf %317, %316 : vector<8x128xf32>
    %319 = arith.divf %317, %318 : vector<8x128xf32>
    %320 = vector.extract_strided_slice %319 {offsets = [0, 0], sizes = [8, 32], strides = [1, 1]} : vector<8x128xf32> to vector<8x32xf32>
    %321 = vector.extract_strided_slice %319 {offsets = [0, 32], sizes = [8, 32], strides = [1, 1]} : vector<8x128xf32> to vector<8x32xf32>
    %322 = vector.extract_strided_slice %319 {offsets = [0, 64], sizes = [8, 32], strides = [1, 1]} : vector<8x128xf32> to vector<8x32xf32>
    %cst_80 = arith.constant 2.000000e+00 : f32
    %323 = vector.broadcast %cst_80 : f32 to vector<8x32xf32>
    %324 = arith.mulf %323, %322 : vector<8x32xf32>
    %cst_81 = arith.constant 1.000000e+00 : f32
    %325 = vector.broadcast %cst_81 : f32 to vector<8x32xf32>
    %326 = arith.subf %324, %325 : vector<8x32xf32>
    %327 = vector.extract_strided_slice %319 {offsets = [0, 96], sizes = [8, 32], strides = [1, 1]} : vector<8x128xf32> to vector<8x32xf32>
    %328 = arith.mulf %321, %281 : vector<8x32xf32>
    %329 = arith.mulf %320, %326 : vector<8x32xf32>
    %330 = arith.addf %328, %329 : vector<8x32xf32>
    %331 = math.tanh %330 : vector<8x32xf32>
    %332 = arith.mulf %327, %331 : vector<8x32xf32>
    %333 = arith.truncf %332 : vector<8x32xf32> to vector<8x32xbf16>
    %cst_82 = arith.constant dense<0.000000e+00> : vector<8x128xf32>
    %334 = tpu.matmul %333, %0, %cst_82 {dimension_numbers = #tpu.dot_dimension_numbers<[1], [0], [0], [1], [0, 0, 1, 1], [], []>} : vector<8x32xbf16>, vector<32x128xbf16>, vector<8x128xf32> -> vector<8x128xf32>
    %335 = arith.truncf %332 : vector<8x32xf32> to vector<8x32xbf16>
    %cst_83 = arith.constant dense<0.000000e+00> : vector<8x128xf32>
    %336 = tpu.matmul %335, %1, %cst_83 {dimension_numbers = #tpu.dot_dimension_numbers<[1], [0], [0], [1], [0, 0, 1, 1], [], []>} : vector<8x32xbf16>, vector<32x128xbf16>, vector<8x128xf32> -> vector<8x128xf32>
    %337 = arith.addf %336, %310 : vector<8x128xf32>
    %338 = arith.mulf %337, %14 : vector<8x128xf32>
    %339 = arith.negf %338 : vector<8x128xf32>
    %340 = math.exp %339 : vector<8x128xf32>
    %cst_84 = arith.constant 1.000000e+00 : f32
    %341 = vector.broadcast %cst_84 : f32 to vector<8x128xf32>
    %342 = arith.addf %341, %340 : vector<8x128xf32>
    %343 = arith.divf %341, %342 : vector<8x128xf32>
    %344 = vector.extract_strided_slice %343 {offsets = [0, 0], sizes = [8, 32], strides = [1, 1]} : vector<8x128xf32> to vector<8x32xf32>
    %345 = vector.extract_strided_slice %343 {offsets = [0, 32], sizes = [8, 32], strides = [1, 1]} : vector<8x128xf32> to vector<8x32xf32>
    %346 = vector.extract_strided_slice %343 {offsets = [0, 64], sizes = [8, 32], strides = [1, 1]} : vector<8x128xf32> to vector<8x32xf32>
    %cst_85 = arith.constant 2.000000e+00 : f32
    %347 = vector.broadcast %cst_85 : f32 to vector<8x32xf32>
    %348 = arith.mulf %347, %346 : vector<8x32xf32>
    %cst_86 = arith.constant 1.000000e+00 : f32
    %349 = vector.broadcast %cst_86 : f32 to vector<8x32xf32>
    %350 = arith.subf %348, %349 : vector<8x32xf32>
    %351 = vector.extract_strided_slice %343 {offsets = [0, 96], sizes = [8, 32], strides = [1, 1]} : vector<8x128xf32> to vector<8x32xf32>
    %352 = arith.mulf %345, %305 : vector<8x32xf32>
    %353 = arith.mulf %344, %350 : vector<8x32xf32>
    %354 = arith.addf %352, %353 : vector<8x32xf32>
    %355 = math.tanh %354 : vector<8x32xf32>
    %356 = arith.mulf %351, %355 : vector<8x32xf32>
    %357 = arith.truncf %356 : vector<8x32xf32> to vector<8x32xbf16>
    %cst_87 = arith.constant dense<0.000000e+00> : vector<8x128xf32>
    %358 = tpu.matmul %357, %2, %cst_87 {dimension_numbers = #tpu.dot_dimension_numbers<[1], [0], [0], [1], [0, 0, 1, 1], [], []>} : vector<8x32xbf16>, vector<32x128xbf16>, vector<8x128xf32> -> vector<8x128xf32>
    %359 = arith.addf %358, %5 : vector<8x128xf32>
    %c7 = arith.constant 7 : index
    %c0_88 = arith.constant 0 : index
    %c0_89 = arith.constant 0 : index
    %360 = vector.load %arg1[%c7, %c0_88, %c0_89] : memref<8x8x128xf32, #tpu.memory_space<vmem>>, vector<1x8x128xf32>
    %361 = vector.shape_cast %360 : vector<1x8x128xf32> to vector<8x128xf32>
    %362 = arith.addf %334, %361 : vector<8x128xf32>
    %363 = arith.mulf %362, %14 : vector<8x128xf32>
    %364 = arith.negf %363 : vector<8x128xf32>
    %365 = math.exp %364 : vector<8x128xf32>
    %cst_90 = arith.constant 1.000000e+00 : f32
    %366 = vector.broadcast %cst_90 : f32 to vector<8x128xf32>
    %367 = arith.addf %366, %365 : vector<8x128xf32>
    %368 = arith.divf %366, %367 : vector<8x128xf32>
    %369 = vector.extract_strided_slice %368 {offsets = [0, 0], sizes = [8, 32], strides = [1, 1]} : vector<8x128xf32> to vector<8x32xf32>
    %370 = vector.extract_strided_slice %368 {offsets = [0, 32], sizes = [8, 32], strides = [1, 1]} : vector<8x128xf32> to vector<8x32xf32>
    %371 = vector.extract_strided_slice %368 {offsets = [0, 64], sizes = [8, 32], strides = [1, 1]} : vector<8x128xf32> to vector<8x32xf32>
    %cst_91 = arith.constant 2.000000e+00 : f32
    %372 = vector.broadcast %cst_91 : f32 to vector<8x32xf32>
    %373 = arith.mulf %372, %371 : vector<8x32xf32>
    %cst_92 = arith.constant 1.000000e+00 : f32
    %374 = vector.broadcast %cst_92 : f32 to vector<8x32xf32>
    %375 = arith.subf %373, %374 : vector<8x32xf32>
    %376 = vector.extract_strided_slice %368 {offsets = [0, 96], sizes = [8, 32], strides = [1, 1]} : vector<8x128xf32> to vector<8x32xf32>
    %377 = arith.mulf %370, %330 : vector<8x32xf32>
    %378 = arith.mulf %369, %375 : vector<8x32xf32>
    %379 = arith.addf %377, %378 : vector<8x32xf32>
    %380 = math.tanh %379 : vector<8x32xf32>
    %381 = arith.mulf %376, %380 : vector<8x32xf32>
    %382 = arith.truncf %381 : vector<8x32xf32> to vector<8x32xbf16>
    %cst_93 = arith.constant dense<0.000000e+00> : vector<8x128xf32>
    %383 = tpu.matmul %382, %1, %cst_93 {dimension_numbers = #tpu.dot_dimension_numbers<[1], [0], [0], [1], [0, 0, 1, 1], [], []>} : vector<8x32xbf16>, vector<32x128xbf16>, vector<8x128xf32> -> vector<8x128xf32>
    %384 = arith.addf %383, %359 : vector<8x128xf32>
    %385 = arith.mulf %384, %14 : vector<8x128xf32>
    %386 = arith.negf %385 : vector<8x128xf32>
    %387 = math.exp %386 : vector<8x128xf32>
    %cst_94 = arith.constant 1.000000e+00 : f32
    %388 = vector.broadcast %cst_94 : f32 to vector<8x128xf32>
    %389 = arith.addf %388, %387 : vector<8x128xf32>
    %390 = arith.divf %388, %389 : vector<8x128xf32>
    %391 = vector.extract_strided_slice %390 {offsets = [0, 0], sizes = [8, 32], strides = [1, 1]} : vector<8x128xf32> to vector<8x32xf32>
    %392 = vector.extract_strided_slice %390 {offsets = [0, 32], sizes = [8, 32], strides = [1, 1]} : vector<8x128xf32> to vector<8x32xf32>
    %393 = vector.extract_strided_slice %390 {offsets = [0, 64], sizes = [8, 32], strides = [1, 1]} : vector<8x128xf32> to vector<8x32xf32>
    %cst_95 = arith.constant 2.000000e+00 : f32
    %394 = vector.broadcast %cst_95 : f32 to vector<8x32xf32>
    %395 = arith.mulf %394, %393 : vector<8x32xf32>
    %cst_96 = arith.constant 1.000000e+00 : f32
    %396 = vector.broadcast %cst_96 : f32 to vector<8x32xf32>
    %397 = arith.subf %395, %396 : vector<8x32xf32>
    %398 = vector.extract_strided_slice %390 {offsets = [0, 96], sizes = [8, 32], strides = [1, 1]} : vector<8x128xf32> to vector<8x32xf32>
    %399 = arith.mulf %392, %354 : vector<8x32xf32>
    %400 = arith.mulf %391, %397 : vector<8x32xf32>
    %401 = arith.addf %399, %400 : vector<8x32xf32>
    %402 = math.tanh %401 : vector<8x32xf32>
    %403 = arith.mulf %398, %402 : vector<8x32xf32>
    %c0_97 = arith.constant 0 : index
    %c0_98 = arith.constant 0 : index
    %404 = vector.load %arg6[%c0_97, %c0_98] : memref<32x1xf32, #tpu.memory_space<vmem>>, vector<32x1xf32>
    %cst_99 = arith.constant dense<0.000000e+00> : vector<8x1xf32>
    %405 = tpu.matmul %403, %404, %cst_99 {dimension_numbers = #tpu.dot_dimension_numbers<[1], [0], [0], [1], [0, 0, 1, 1], [], []>} : vector<8x32xf32>, vector<32x1xf32>, vector<8x1xf32> -> vector<8x1xf32>
    %c0_100 = arith.constant 0 : index
    %c0_101 = arith.constant 0 : index
    %406 = vector.load %arg7[%c0_100, %c0_101] : memref<1x1xf32, #tpu.memory_space<vmem>>, vector<1x1xf32>
    %407 = vector.broadcast %406 : vector<1x1xf32> to vector<8x1xf32>
    %408 = arith.addf %405, %407 : vector<8x1xf32>
    %c0_102 = arith.constant 0 : index
    %c0_103 = arith.constant 0 : index
    %409 = vector.load %arg8[%c0_102, %c0_103] : memref<8x1xf32, #tpu.memory_space<vmem>>, vector<8x1xf32>
    tpu.vector_store %arg8[%c0_102, %c0_103], %408 {strides = array<i32>} : memref<8x1xf32, #tpu.memory_space<vmem>>, vector<8x1xf32>,
    return
  }
  func.func @transform_0(%arg0: i32) -> (i32, i32, i32) {
    %c0_i32 = arith.constant 0 : i32
    %c0_i32_0 = arith.constant 0 : i32
    %c0_i32_1 = arith.constant 0 : i32
    return %c0_i32, %arg0, %c0_i32_0 : i32, i32, i32
  }
  func.func @transform_1(%arg0: i32) -> (i32, i32) {
    %c0_i32 = arith.constant 0 : i32
    %c0_i32_0 = arith.constant 0 : i32
    %c0_i32_1 = arith.constant 0 : i32
    return %c0_i32, %c0_i32_0 : i32, i32
  }
  func.func @transform_2(%arg0: i32) -> (i32, i32) {
    %c0_i32 = arith.constant 0 : i32
    %c0_i32_0 = arith.constant 0 : i32
    %c0_i32_1 = arith.constant 0 : i32
    return %c0_i32, %c0_i32_0 : i32, i32
  }
  func.func @transform_3(%arg0: i32) -> (i32, i32) {
    %c0_i32 = arith.constant 0 : i32
    %c0_i32_0 = arith.constant 0 : i32
    %c0_i32_1 = arith.constant 0 : i32
    return %c0_i32, %c0_i32_0 : i32, i32
  }
  func.func @transform_4(%arg0: i32) -> (i32, i32) {
    %c0_i32 = arith.constant 0 : i32
    %c0_i32_0 = arith.constant 0 : i32
    %c0_i32_1 = arith.constant 0 : i32
    return %c0_i32, %c0_i32_0 : i32, i32
  }
  func.func @transform_5(%arg0: i32) -> (i32, i32) {
    %c0_i32 = arith.constant 0 : i32
    %c0_i32_0 = arith.constant 0 : i32
    %c0_i32_1 = arith.constant 0 : i32
    return %c0_i32, %c0_i32_0 : i32, i32
  }
  func.func @transform_6(%arg0: i32) -> (i32, i32) {
    %c0_i32 = arith.constant 0 : i32
    %c0_i32_0 = arith.constant 0 : i32
    %c0_i32_1 = arith.constant 0 : i32
    return %c0_i32, %c0_i32_0 : i32, i32
  }
  func.func @transform_7(%arg0: i32) -> (i32, i32) {
    %c0_i32 = arith.constant 0 : i32
    %c0_i32_0 = arith.constant 0 : i32
    return %arg0, %c0_i32 : i32, i32
  }
}

</mosaic_0001>

<llo_original>
// kernel: tpu_custom_call.1
$region0: #{tpu_custom_call.1}
  #allocation0 [shape = 'u32[]', space=smem, size = 0x4, offset = 0x4, fixed_abs, tag = 'smem constant byte address 0x4 - core index']
  #allocation1 [shape = 'u32[72,128]{1,0:T(1,128)}', space=vmem, size = 0x9000, scoped, tag = 'internal scratch']
  #allocation2 [shape = 'f32[1,1]{1,0:T(1,128)S(1)}', space=vmem, size = 0x200, scoped, tag = 'scoped memory for tpu_custom_call.1']
  %s0 = inlined_call_operand.hbm [shape: f32[8,8,128], index: 0, kind: input, shape index: {}]
  %s1 = inlined_call_operand.vmem [shape: bf16[32,128], index: 1, kind: input, shape index: {}]
  %s2 = inlined_call_operand.vmem [shape: bf16[32,128], index: 2, kind: input, shape index: {}]
  %s3 = inlined_call_operand.hbm [shape: bf16[32,128], index: 3, kind: input, shape index: {}]
  %s4 = inlined_call_operand.vmem [shape: f32[1,128], index: 4, kind: input, shape index: {}]
  %s5 = inlined_call_operand.vmem [shape: f32[32,1], index: 5, kind: input, shape index: {}]
  %s6 = inlined_call_operand.<no memory space> [shape: f32[1,1], index: 6, kind: input, shape index: {}]
  %s7 = inlined_call_operand.vmem [shape: f32[8,1], index: 7, kind: output, shape index: {}]
  %s8 = sld [smem:[#allocation0]]
  $region46: #{tpu_custom_call.1} parent=0
    _
  %s10 = ssub.s32 1, %s8
  %s11 = scalar_select 0, %s10, %s8
  %v12 = vstv %s6
  %13 = vst [vmem:[#allocation2] sm:$0x1] %v12
  $region1: #{tpu_custom_call.1} parent=0
    #allocation3 [shape = 'u8[32768]{0}', space=vmem, size = 0x8000, scoped, tag = 'input window, operand 0, single buffered']
    #allocation4 [shape = 's32[1]{0}', space=sflag, size = 0x4, scoped, tag = 'scoped memory for tpu_custom_call.1']
    #allocation5 [shape = 'u8[8192]{0}', space=vmem, size = 0x2000, scoped, tag = 'input window, operand 3, single buffered']
    #allocation6 [shape = 's32[1]{0}', space=sflag, size = 0x4, scoped, tag = 'scoped memory for tpu_custom_call.1']
    %14 = vsyncpa [#allocation4], 0
    %15 = vsyncpa [#allocation6], 0
    // Predicated region
    $region2: #{tpu_custom_call.1} parent=1 // pred_check
      _
    $region3: #{tpu_custom_call.1} parent=1 // pred_check_branch
      %17 = sbr.rel (0) target = $region5
    $region4: #{tpu_custom_call.1} parent=1 // pred_region
      %19 = vsyncadd [#allocation4], 0
      %s20 = sshll.u32 %s0, 4
      %s21 = int_to_ptr.hbm [resolvable:$true] %s20
      %s22 = sshll.u32 [#allocation3], 4
      %s23 = int_to_ptr.vmem [resolvable:$true] %s22
      %28 = dma.hbm_to_vmem [thread:$0]  %s21, 1024, %s23, [#allocation4], 128, 128, 8
    $region5: #{tpu_custom_call.1} parent=1 // pred_fallthru
      _
    // Predicated region
    $region6: #{tpu_custom_call.1} parent=1 // pred_check
      _
    $region7: #{tpu_custom_call.1} parent=1 // pred_check_branch
      %30 = sbr.rel (0) target = $region9
    $region8: #{tpu_custom_call.1} parent=1 // pred_region
      _
    $region9: #{tpu_custom_call.1} parent=1 // pred_fallthru
      _
    // Predicated region
    $region10: #{tpu_custom_call.1} parent=1 // pred_check
      _
    $region11: #{tpu_custom_call.1} parent=1 // pred_check_branch
      %32 = sbr.rel (0) target = $region13
    $region12: #{tpu_custom_call.1} parent=1 // pred_region
      _
    $region13: #{tpu_custom_call.1} parent=1 // pred_fallthru
      _
    // Predicated region
    $region14: #{tpu_custom_call.1} parent=1 // pred_check
      _
    $region15: #{tpu_custom_call.1} parent=1 // pred_check_branch
      %34 = sbr.rel (0) target = $region17
    $region16: #{tpu_custom_call.1} parent=1 // pred_region
      %36 = vsyncadd [#allocation6], 0
      %s37 = sshll.u32 %s3, 4
      %s38 = int_to_ptr.hbm [resolvable:$true] %s37
      %s39 = sshll.u32 [#allocation5], 4
      %s40 = int_to_ptr.vmem [resolvable:$true] %s39
      %45 = dma.hbm_to_vmem [thread:$0]  %s38, 256, %s40, [#allocation6], 64, 64, 4
    $region17: #{tpu_custom_call.1} parent=1 // pred_fallthru
      _
    // Predicated region
    $region18: #{tpu_custom_call.1} parent=1 // pred_check
      _
    $region19: #{tpu_custom_call.1} parent=1 // pred_check_branch
      %47 = sbr.rel (0) target = $region21
    $region20: #{tpu_custom_call.1} parent=1 // pred_region
      _
    $region21: #{tpu_custom_call.1} parent=1 // pred_fallthru
      _
    // Predicated region
    $region22: #{tpu_custom_call.1} parent=1 // pred_check
      _
    $region23: #{tpu_custom_call.1} parent=1 // pred_check_branch
      %49 = sbr.rel (0) target = $region25
    $region24: #{tpu_custom_call.1} parent=1 // pred_region
      _
    $region25: #{tpu_custom_call.1} parent=1 // pred_fallthru
      _
    // Predicated region
    $region26: #{tpu_custom_call.1} parent=1 // pred_check
      _
    $region27: #{tpu_custom_call.1} parent=1 // pred_check_branch
      %51 = sbr.rel (0) target = $region29
    $region28: #{tpu_custom_call.1} parent=1 // pred_region
      _
    $region29: #{tpu_custom_call.1} parent=1 // pred_fallthru
      _
    // Predicated region
    $region30: #{tpu_custom_call.1} parent=1 // pred_check
      _
    $region31: #{tpu_custom_call.1} parent=1 // pred_check_branch
      %53 = sbr.rel (0) target = $region33
    $region32: #{tpu_custom_call.1} parent=1 // pred_region
      %55 = dma.done [#allocation4], 1024
    $region33: #{tpu_custom_call.1} parent=1 // pred_fallthru
      _
    // Predicated region
    $region34: #{tpu_custom_call.1} parent=1 // pred_check
      _
    $region35: #{tpu_custom_call.1} parent=1 // pred_check_branch
      %57 = sbr.rel (0) target = $region37
    $region36: #{tpu_custom_call.1} parent=1 // pred_region
      %59 = dma.done [#allocation6], 256
    $region37: #{tpu_custom_call.1} parent=1 // pred_fallthru
      _
    %v61 = vld [vmem:[%s1] sm:$0xf]
    %v62 = vld [vmem:[%s1 + $0x4] sm:$0xf]
    %v63 = vld [vmem:[%s1 + $0x8] sm:$0xf]
    %v64 = vld [vmem:[%s1 + $0xc] sm:$0xf]
    %v65 = vld [vmem:[%s2] sm:$0xf]
    %v66 = vld [vmem:[%s2 + $0x4] sm:$0xf]
    %v67 = vld [vmem:[%s2 + $0x8] sm:$0xf]
    %v68 = vld [vmem:[%s2 + $0xc] sm:$0xf]
    %v69 = vld [vmem:[#allocation5] sm:$0xf]
    %v70 = vld [vmem:[#allocation5 + $0x4] sm:$0xf]
    %v71 = vld [vmem:[#allocation5 + $0x8] sm:$0xf]
    %v72 = vld [vmem:[#allocation5 + $0xc] sm:$0xf]
    %v73 = vld [vmem:[%s4] sm:$0x1]
    %v75 = vperm.slane %v73, 0
    %v77 = vlaneseq
    %v78 = vand.u32 %v77, 127
    %vm79 = vcmp.ge.s32.totalorder %v78, 64
    %vm80 = vcmp.lt.s32.totalorder %v78, 96
    %vm81 = vmand %vm79, %vm80
    %v82 = vsel %vm81, 2.0, 1.0
    %v83 = vld [vmem:[#allocation3] sm:$0xff]
    %v84 = vadd.f32 %v83, 0.0
    %v85 = vmul.f32 %v84, %v82
    %v86 = vxor.u32 %v85, 2147483648
    %v87 = vmul.f32 %v86, 1.442695
    %v88 = vpow.pop %v87
    %v89 = vadd.f32 %v88, 1.0
    %v90 = vrcp.pop %v89
    %v91 = vmul.f32 %v89, %v90
    %v92 = vsub.f32 1.0, %v91
    %v93 = vmul.f32 %v90, %v92
    %v94 = vadd.f32 %v90, %v93
    %vm95 = vweird.f32 %v89
    %vm96 = vweird.f32 %v90
    %vm97 = vmor %vm95, %vm96
    %v98 = vsel %vm97, %v90, %v94
    %v99 = vand.u32 2147483647, %v89
    %vm100 = vcmp.eq.f32.partialorder %v99, 8.507059e+37
    %v101 = vand.u32 %v89, 2147483648
    %v102 = vor.u32 1.1754944e-38, %v101
    %v103 = vsel %vm100, %v102, %v98
    %v104 = vmul.f32 1.0, %v103
    %v105 = vmul.f32 %v104, 2.0
    %v106 = vsub.f32 %v105, 1.0
    %v107 = vmul.f32 %v104, 0.0
    %109 = vrot.lane.b32.xlu0 %v106, 64
    %v110 = vpop.permute.xlu0 %109
    %v112 = vmul.f32 %v104, %v110
    %114 = vrot.lane.b32.xlu0 %v112, 32
    %v115 = vpop.permute.xlu0 %114
    %v117 = vadd.f32 %v107, %v115
    %v118 = vtanh.pop %v117
    %120 = vrot.lane.b32.xlu0 %v118, 64
    %v121 = vpop.permute.xlu0 %120
    %v123 = vmul.f32 %v104, %v121
    %v124 = vpack.c.bf16 %v123, %v123
    %126 = vrot.lane.b32.xlu0 %v124, 32
    %v127 = vpop.permute.xlu0 %126
    %v132 = vunpack.c.l.b16 %v65
    %v133 = vunpack.c.l.b16 %v66
    %v134 = vunpack.c.l.b16 %v67
    %v135 = vunpack.c.l.b16 %v68
    %v136 = vpack.c.b16 %v133, %v132
    %v137 = vpack.c.b16 %v135, %v134
    %vm140 = vcmask 261120
    %v142 = vsel %vm140, %v127, 0
    %144 = vmatpush.bf16.msra.mxu0 0
    %145 = vmatpush.bf16.msra.mxu0 0
    %146 = vmatpush.bf16.msra.mxu0 0
    %147 = vmatpush.bf16.msra.mxu0 0
    %148 = vmatpush.bf16.msra.mxu0 0
    %149 = vmatpush.bf16.msra.mxu0 0
    %150 = vmatpush.bf16.msra.mxu0 %v137
    %151 = vmatpush.bf16.msra.mxu0 %v136
    %152 = vmatmul.bf16.gmra.mxu0 %v142
    %v153 = vpop.f32.mrf.mxu0
    %v154 = vadd.f32 %v75, %v153
    %v155 = vpop.f32.mrf.mxu0
    %156 = vdwg.mxu0
    %v157 = vmul.f32 %v154, %v82
    %v158 = vxor.u32 %v157, 2147483648
    %v159 = vmul.f32 %v158, 1.442695
    %v160 = vpow.pop %v159
    %v161 = vadd.f32 %v160, 1.0
    %v162 = vrcp.pop %v161
    %v163 = vmul.f32 %v161, %v162
    %v164 = vsub.f32 1.0, %v163
    %v165 = vmul.f32 %v162, %v164
    %v166 = vadd.f32 %v162, %v165
    %vm167 = vweird.f32 %v161
    %vm168 = vweird.f32 %v162
    %vm169 = vmor %vm167, %vm168
    %v170 = vsel %vm169, %v162, %v166
    %v171 = vand.u32 2147483647, %v161
    %vm172 = vcmp.eq.f32.partialorder %v171, 8.507059e+37
    %v173 = vand.u32 %v161, 2147483648
    %v174 = vor.u32 1.1754944e-38, %v173
    %v175 = vsel %vm172, %v174, %v170
    %v176 = vmul.f32 1.0, %v175
    %v177 = vmul.f32 %v176, 2.0
    %v178 = vsub.f32 %v177, 1.0
    %v179 = vmul.f32 %v176, 0.0
    %181 = vrot.lane.b32.xlu0 %v178, 64
    %v182 = vpop.permute.xlu0 %181
    %v184 = vmul.f32 %v176, %v182
    %186 = vrot.lane.b32.xlu0 %v184, 32
    %v187 = vpop.permute.xlu0 %186
    %v189 = vadd.f32 %v179, %v187
    %v190 = vtanh.pop %v189
    %192 = vrot.lane.b32.xlu0 %v190, 64
    %v193 = vpop.permute.xlu0 %192
    %v195 = vmul.f32 %v176, %v193
    %v196 = vpack.c.bf16 %v195, %v195
    %198 = vrot.lane.b32.xlu0 %v196, 32
    %v199 = vpop.permute.xlu0 %198
    %v204 = vunpack.c.l.b16 %v69
    %v205 = vunpack.c.l.b16 %v70
    %v206 = vunpack.c.l.b16 %v71
    %v207 = vunpack.c.l.b16 %v72
    %v208 = vpack.c.b16 %v205, %v204
    %v209 = vpack.c.b16 %v207, %v206
    %v213 = vsel %vm140, %v199, 0
    %215 = vmatpush.bf16.msra.mxu0 0
    %216 = vmatpush.bf16.msra.mxu0 0
    %217 = vmatpush.bf16.msra.mxu0 0
    %218 = vmatpush.bf16.msra.mxu0 0
    %219 = vmatpush.bf16.msra.mxu0 0
    %220 = vmatpush.bf16.msra.mxu0 0
    %221 = vmatpush.bf16.msra.mxu0 %v209
    %222 = vmatpush.bf16.msra.mxu0 %v208
    %223 = vmatmul.bf16.gmra.mxu0 %v213
    %v224 = vpop.f32.mrf.mxu0
    %v225 = vadd.f32 %v75, %v224
    %v226 = vpop.f32.mrf.mxu0
    %227 = vdwg.mxu0
    %s228 = scalar_lea.vmem [#allocation3], 8
    %v229 = vld [vmem:[%s228] sm:$0xff]
    %v234 = vunpack.c.l.b16 %v61
    %v235 = vunpack.c.l.b16 %v62
    %v236 = vunpack.c.l.b16 %v63
    %v237 = vunpack.c.l.b16 %v64
    %v238 = vpack.c.b16 %v235, %v234
    %v239 = vpack.c.b16 %v237, %v236
    %242 = vmatpush.bf16.msra.mxu0 0
    %243 = vmatpush.bf16.msra.mxu0 0
    %244 = vmatpush.bf16.msra.mxu0 0
    %245 = vmatpush.bf16.msra.mxu0 0
    %246 = vmatpush.bf16.msra.mxu0 0
    %247 = vmatpush.bf16.msra.mxu0 0
    %248 = vmatpush.bf16.msra.mxu0 %v239
    %249 = vmatpush.bf16.msra.mxu0 %v238
    %250 = vmatmul.bf16.gmra.mxu0 %v142
    %v251 = vpop.f32.mrf.mxu0
    %v252 = vadd.f32 %v229, %v251
    %v253 = vpop.f32.mrf.mxu0
    %254 = vdwg.mxu0
    %v255 = vmul.f32 %v252, %v82
    %v256 = vxor.u32 %v255, 2147483648
    %v257 = vmul.f32 %v256, 1.442695
    %v258 = vpow.pop %v257
    %v259 = vadd.f32 %v258, 1.0
    %v260 = vrcp.pop %v259
    %v261 = vmul.f32 %v259, %v260
    %v262 = vsub.f32 1.0, %v261
    %v263 = vmul.f32 %v260, %v262
    %v264 = vadd.f32 %v260, %v263
    %vm265 = vweird.f32 %v259
    %vm266 = vweird.f32 %v260
    %vm267 = vmor %vm265, %vm266
    %v268 = vsel %vm267, %v260, %v264
    %v269 = vand.u32 2147483647, %v259
    %vm270 = vcmp.eq.f32.partialorder %v269, 8.507059e+37
    %v271 = vand.u32 %v259, 2147483648
    %v272 = vor.u32 1.1754944e-38, %v271
    %v273 = vsel %vm270, %v272, %v268
    %v274 = vmul.f32 1.0, %v273
    %v275 = vmul.f32 %v274, 2.0
    %v276 = vsub.f32 %v275, 1.0
    %v277 = vmul.f32 %v274, %v117
    %279 = vrot.lane.b32.xlu0 %v276, 64
    %v280 = vpop.permute.xlu0 %279
    %v282 = vmul.f32 %v274, %v280
    %284 = vrot.lane.b32.xlu0 %v282, 32
    %v285 = vpop.permute.xlu0 %284
    %v287 = vadd.f32 %v277, %v285
    %v288 = vtanh.pop %v287
    %290 = vrot.lane.b32.xlu0 %v288, 64
    %v291 = vpop.permute.xlu0 %290
    %v293 = vmul.f32 %v274, %v291
    %v294 = vpack.c.bf16 %v293, %v293
    %296 = vrot.lane.b32.xlu0 %v294, 32
    %v297 = vpop.permute.xlu0 %296
    %v299 = vsel %vm140, %v297, 0
    %301 = vmatpush.bf16.msra.mxu0 0
    %302 = vmatpush.bf16.msra.mxu0 0
    %303 = vmatpush.bf16.msra.mxu0 0
    %304 = vmatpush.bf16.msra.mxu0 0
    %305 = vmatpush.bf16.msra.mxu0 0
    %306 = vmatpush.bf16.msra.mxu0 0
    %307 = vmatpush.bf16.msra.mxu0 %v137
    %308 = vmatpush.bf16.msra.mxu0 %v136
    %309 = vmatmul.bf16.gmra.mxu0 %v299
    %v310 = vpop.f32.mrf.mxu0
    %v311 = vadd.f32 %v225, %v310
    %v312 = vpop.f32.mrf.mxu0
    %313 = vdwg.mxu0
    %v314 = vmul.f32 %v311, %v82
    %v315 = vxor.u32 %v314, 2147483648
    %v316 = vmul.f32 %v315, 1.442695
    %v317 = vpow.pop %v316
    %v318 = vadd.f32 %v317, 1.0
    %v319 = vrcp.pop %v318
    %v320 = vmul.f32 %v318, %v319
    %v321 = vsub.f32 1.0, %v320
    %v322 = vmul.f32 %v319, %v321
    %v323 = vadd.f32 %v319, %v322
    %vm324 = vweird.f32 %v318
    %vm325 = vweird.f32 %v319
    %vm326 = vmor %vm324, %vm325
    %v327 = vsel %vm326, %v319, %v323
    %v328 = vand.u32 2147483647, %v318
    %vm329 = vcmp.eq.f32.partialorder %v328, 8.507059e+37
    %v330 = vand.u32 %v318, 2147483648
    %v331 = vor.u32 1.1754944e-38, %v330
    %v332 = vsel %vm329, %v331, %v327
    %v333 = vmul.f32 1.0, %v332
    %v334 = vmul.f32 %v333, 2.0
    %v335 = vsub.f32 %v334, 1.0
    %v336 = vmul.f32 %v333, %v189
    %338 = vrot.lane.b32.xlu0 %v335, 64
    %v339 = vpop.permute.xlu0 %338
    %v341 = vmul.f32 %v333, %v339
    %343 = vrot.lane.b32.xlu0 %v341, 32
    %v344 = vpop.permute.xlu0 %343
    %v346 = vadd.f32 %v336, %v344
    %v347 = vtanh.pop %v346
    %349 = vrot.lane.b32.xlu0 %v347, 64
    %v350 = vpop.permute.xlu0 %349
    %v352 = vmul.f32 %v333, %v350
    %v353 = vpack.c.bf16 %v352, %v352
    %355 = vrot.lane.b32.xlu0 %v353, 32
    %v356 = vpop.permute.xlu0 %355
    %v358 = vsel %vm140, %v356, 0
    %360 = vmatpush.bf16.msra.mxu0 0
    %361 = vmatpush.bf16.msra.mxu0 0
    %362 = vmatpush.bf16.msra.mxu0 0
    %363 = vmatpush.bf16.msra.mxu0 0
    %364 = vmatpush.bf16.msra.mxu0 0
    %365 = vmatpush.bf16.msra.mxu0 0
    %366 = vmatpush.bf16.msra.mxu0 %v209
    %367 = vmatpush.bf16.msra.mxu0 %v208
    %368 = vmatmul.bf16.gmra.mxu0 %v358
    %v369 = vpop.f32.mrf.mxu0
    %v370 = vadd.f32 %v75, %v369
    %v371 = vpop.f32.mrf.mxu0
    %372 = vdwg.mxu0
    %s373 = scalar_lea.vmem [#allocation3], 16
    %v374 = vld [vmem:[%s373] sm:$0xff]
    %375 = vmatpush.bf16.msra.mxu0 0
    %376 = vmatpush.bf16.msra.mxu0 0
    %377 = vmatpush.bf16.msra.mxu0 0
    %378 = vmatpush.bf16.msra.mxu0 0
    %379 = vmatpush.bf16.msra.mxu0 0
    %380 = vmatpush.bf16.msra.mxu0 0
    %381 = vmatpush.bf16.msra.mxu0 %v239
    %382 = vmatpush.bf16.msra.mxu0 %v238
    %383 = vmatmul.bf16.gmra.mxu0 %v299
    %v384 = vpop.f32.mrf.mxu0
    %v385 = vadd.f32 %v374, %v384
    %v386 = vpop.f32.mrf.mxu0
    %387 = vdwg.mxu0
    %v388 = vmul.f32 %v385, %v82
    %v389 = vxor.u32 %v388, 2147483648
    %v390 = vmul.f32 %v389, 1.442695
    %v391 = vpow.pop %v390
    %v392 = vadd.f32 %v391, 1.0
    %v393 = vrcp.pop %v392
    %v394 = vmul.f32 %v392, %v393
    %v395 = vsub.f32 1.0, %v394
    %v396 = vmul.f32 %v393, %v395
    %v397 = vadd.f32 %v393, %v396
    %vm398 = vweird.f32 %v392
    %vm399 = vweird.f32 %v393
    %vm400 = vmor %vm398, %vm399
    %v401 = vsel %vm400, %v393, %v397
    %v402 = vand.u32 2147483647, %v392
    %vm403 = vcmp.eq.f32.partialorder %v402, 8.507059e+37
    %v404 = vand.u32 %v392, 2147483648
    %v405 = vor.u32 1.1754944e-38, %v404
    %v406 = vsel %vm403, %v405, %v401
    %v407 = vmul.f32 1.0, %v406
    %v408 = vmul.f32 %v407, 2.0
    %v409 = vsub.f32 %v408, 1.0
    %v410 = vmul.f32 %v407, %v287
    %412 = vrot.lane.b32.xlu0 %v409, 64
    %v413 = vpop.permute.xlu0 %412
    %v415 = vmul.f32 %v407, %v413
    %417 = vrot.lane.b32.xlu0 %v415, 32
    %v418 = vpop.permute.xlu0 %417
    %v420 = vadd.f32 %v410, %v418
    %v421 = vtanh.pop %v420
    %423 = vrot.lane.b32.xlu0 %v421, 64
    %v424 = vpop.permute.xlu0 %423
    %v426 = vmul.f32 %v407, %v424
    %v427 = vpack.c.bf16 %v426, %v426
    %429 = vrot.lane.b32.xlu0 %v427, 32
    %v430 = vpop.permute.xlu0 %429
    %v432 = vsel %vm140, %v430, 0
    %434 = vmatpush.bf16.msra.mxu0 0
    %435 = vmatpush.bf16.msra.mxu0 0
    %436 = vmatpush.bf16.msra.mxu0 0
    %437 = vmatpush.bf16.msra.mxu0 0
    %438 = vmatpush.bf16.msra.mxu0 0
    %439 = vmatpush.bf16.msra.mxu0 0
    %440 = vmatpush.bf16.msra.mxu0 %v137
    %441 = vmatpush.bf16.msra.mxu0 %v136
    %442 = vmatmul.bf16.gmra.mxu0 %v432
    %v443 = vpop.f32.mrf.mxu0
    %v444 = vadd.f32 %v370, %v443
    %v445 = vpop.f32.mrf.mxu0
    %446 = vdwg.mxu0
    %v447 = vmul.f32 %v444, %v82
    %v448 = vxor.u32 %v447, 2147483648
    %v449 = vmul.f32 %v448, 1.442695
    %v450 = vpow.pop %v449
    %v451 = vadd.f32 %v450, 1.0
    %v452 = vrcp.pop %v451
    %v453 = vmul.f32 %v451, %v452
    %v454 = vsub.f32 1.0, %v453
    %v455 = vmul.f32 %v452, %v454
    %v456 = vadd.f32 %v452, %v455
    %vm457 = vweird.f32 %v451
    %vm458 = vweird.f32 %v452
    %vm459 = vmor %vm457, %vm458
    %v460 = vsel %vm459, %v452, %v456
    %v461 = vand.u32 2147483647, %v451
    %vm462 = vcmp.eq.f32.partialorder %v461, 8.507059e+37
    %v463 = vand.u32 %v451, 2147483648
    %v464 = vor.u32 1.1754944e-38, %v463
    %v465 = vsel %vm462, %v464, %v460
    %v466 = vmul.f32 1.0, %v465
    %v467 = vmul.f32 %v466, 2.0
    %v468 = vsub.f32 %v467, 1.0
    %v469 = vmul.f32 %v466, %v346
    %471 = vrot.lane.b32.xlu0 %v468, 64
    %v472 = vpop.permute.xlu0 %471
    %v474 = vmul.f32 %v466, %v472
    %476 = vrot.lane.b32.xlu0 %v474, 32
    %v477 = vpop.permute.xlu0 %476
    %v479 = vadd.f32 %v469, %v477
    %v480 = vtanh.pop %v479
    %482 = vrot.lane.b32.xlu0 %v480, 64
    %v483 = vpop.permute.xlu0 %482
    %v485 = vmul.f32 %v466, %v483
    %v486 = vpack.c.bf16 %v485, %v485
    %488 = vrot.lane.b32.xlu0 %v486, 32
    %v489 = vpop.permute.xlu0 %488
    %v491 = vsel %vm140, %v489, 0
    %493 = vmatpush.bf16.msra.mxu0 0
    %494 = vmatpush.bf16.msra.mxu0 0
    %495 = vmatpush.bf16.msra.mxu0 0
    %496 = vmatpush.bf16.msra.mxu0 0
    %497 = vmatpush.bf16.msra.mxu0 0
    %498 = vmatpush.bf16.msra.mxu0 0
    %499 = vmatpush.bf16.msra.mxu0 %v209
    %500 = vmatpush.bf16.msra.mxu0 %v208
    %501 = vmatmul.bf16.gmra.mxu0 %v491
    %v502 = vpop.f32.mrf.mxu0
    %v503 = vadd.f32 %v75, %v502
    %v504 = vpop.f32.mrf.mxu0
    %505 = vdwg.mxu0
    %s506 = scalar_lea.vmem [#allocation3], 24
    %v507 = vld [vmem:[%s506] sm:$0xff]
    %508 = vmatpush.bf16.msra.mxu0 0
    %509 = vmatpush.bf16.msra.mxu0 0
    %510 = vmatpush.bf16.msra.mxu0 0
    %511 = vmatpush.bf16.msra.mxu0 0
    %512 = vmatpush.bf16.msra.mxu0 0
    %513 = vmatpush.bf16.msra.mxu0 0
    %514 = vmatpush.bf16.msra.mxu0 %v239
    %515 = vmatpush.bf16.msra.mxu0 %v238
    %516 = vmatmul.bf16.gmra.mxu0 %v432
    %v517 = vpop.f32.mrf.mxu0
    %v518 = vadd.f32 %v507, %v517
    %v519 = vpop.f32.mrf.mxu0
    %520 = vdwg.mxu0
    %v521 = vmul.f32 %v518, %v82
    %v522 = vxor.u32 %v521, 2147483648
    %v523 = vmul.f32 %v522, 1.442695
    %v524 = vpow.pop %v523
    %v525 = vadd.f32 %v524, 1.0
    %v526 = vrcp.pop %v525
    %v527 = vmul.f32 %v525, %v526
    %v528 = vsub.f32 1.0, %v527
    %v529 = vmul.f32 %v526, %v528
    %v530 = vadd.f32 %v526, %v529
    %vm531 = vweird.f32 %v525
    %vm532 = vweird.f32 %v526
    %vm533 = vmor %vm531, %vm532
    %v534 = vsel %vm533, %v526, %v530
    %v535 = vand.u32 2147483647, %v525
    %vm536 = vcmp.eq.f32.partialorder %v535, 8.507059e+37
    %v537 = vand.u32 %v525, 2147483648
    %v538 = vor.u32 1.1754944e-38, %v537
    %v539 = vsel %vm536, %v538, %v534
    %v540 = vmul.f32 1.0, %v539
    %v541 = vmul.f32 %v540, 2.0
    %v542 = vsub.f32 %v541, 1.0
    %v543 = vmul.f32 %v540, %v420
    %545 = vrot.lane.b32.xlu0 %v542, 64
    %v546 = vpop.permute.xlu0 %545
    %v548 = vmul.f32 %v540, %v546
    %550 = vrot.lane.b32.xlu0 %v548, 32
    %v551 = vpop.permute.xlu0 %550
    %v553 = vadd.f32 %v543, %v551
    %v554 = vtanh.pop %v553
    %556 = vrot.lane.b32.xlu0 %v554, 64
    %v557 = vpop.permute.xlu0 %556
    %v559 = vmul.f32 %v540, %v557
    %v560 = vpack.c.bf16 %v559, %v559
    %562 = vrot.lane.b32.xlu0 %v560, 32
    %v563 = vpop.permute.xlu0 %562
    %v565 = vsel %vm140, %v563, 0
    %567 = vmatpush.bf16.msra.mxu0 0
    %568 = vmatpush.bf16.msra.mxu0 0
    %569 = vmatpush.bf16.msra.mxu0 0
    %570 = vmatpush.bf16.msra.mxu0 0
    %571 = vmatpush.bf16.msra.mxu0 0
    %572 = vmatpush.bf16.msra.mxu0 0
    %573 = vmatpush.bf16.msra.mxu0 %v137
    %574 = vmatpush.bf16.msra.mxu0 %v136
    %575 = vmatmul.bf16.gmra.mxu0 %v565
    %v576 = vpop.f32.mrf.mxu0
    %v577 = vadd.f32 %v503, %v576
    %v578 = vpop.f32.mrf.mxu0
    %579 = vdwg.mxu0
    %v580 = vmul.f32 %v577, %v82
    %v581 = vxor.u32 %v580, 2147483648
    %v582 = vmul.f32 %v581, 1.442695
    %v583 = vpow.pop %v582
    %v584 = vadd.f32 %v583, 1.0
    %v585 = vrcp.pop %v584
    %v586 = vmul.f32 %v584, %v585
    %v587 = vsub.f32 1.0, %v586
    %v588 = vmul.f32 %v585, %v587
    %v589 = vadd.f32 %v585, %v588
    %vm590 = vweird.f32 %v584
    %vm591 = vweird.f32 %v585
    %vm592 = vmor %vm590, %vm591
    %v593 = vsel %vm592, %v585, %v589
    %v594 = vand.u32 2147483647, %v584
    %vm595 = vcmp.eq.f32.partialorder %v594, 8.507059e+37
    %v596 = vand.u32 %v584, 2147483648
    %v597 = vor.u32 1.1754944e-38, %v596
    %v598 = vsel %vm595, %v597, %v593
    %v599 = vmul.f32 1.0, %v598
    %v600 = vmul.f32 %v599, 2.0
    %v601 = vsub.f32 %v600, 1.0
    %v602 = vmul.f32 %v599, %v479
    %604 = vrot.lane.b32.xlu0 %v601, 64
    %v605 = vpop.permute.xlu0 %604
    %v607 = vmul.f32 %v599, %v605
    %609 = vrot.lane.b32.xlu0 %v607, 32
    %v610 = vpop.permute.xlu0 %609
    %v612 = vadd.f32 %v602, %v610
    %v613 = vtanh.pop %v612
    %615 = vrot.lane.b32.xlu0 %v613, 64
    %v616 = vpop.permute.xlu0 %615
    %v618 = vmul.f32 %v599, %v616
    %v619 = vpack.c.bf16 %v618, %v618
    %621 = vrot.lane.b32.xlu0 %v619, 32
    %v622 = vpop.permute.xlu0 %621
    %v624 = vsel %vm140, %v622, 0
    %626 = vmatpush.bf16.msra.mxu0 0
    %627 = vmatpush.bf16.msra.mxu0 0
    %628 = vmatpush.bf16.msra.mxu0 0
    %629 = vmatpush.bf16.msra.mxu0 0
    %630 = vmatpush.bf16.msra.mxu0 0
    %631 = vmatpush.bf16.msra.mxu0 0
    %632 = vmatpush.bf16.msra.mxu0 %v209
    %633 = vmatpush.bf16.msra.mxu0 %v208
    %634 = vmatmul.bf16.gmra.mxu0 %v624
    %v635 = vpop.f32.mrf.mxu0
    %v636 = vadd.f32 %v75, %v635
    %v637 = vpop.f32.mrf.mxu0
    %638 = vdwg.mxu0
    %s639 = scalar_lea.vmem [#allocation3], 32
    %v640 = vld [vmem:[%s639] sm:$0xff]
    %641 = vmatpush.bf16.msra.mxu0 0
    %642 = vmatpush.bf16.msra.mxu0 0
    %643 = vmatpush.bf16.msra.mxu0 0
    %644 = vmatpush.bf16.msra.mxu0 0
    %645 = vmatpush.bf16.msra.mxu0 0
    %646 = vmatpush.bf16.msra.mxu0 0
    %647 = vmatpush.bf16.msra.mxu0 %v239
    %648 = vmatpush.bf16.msra.mxu0 %v238
    %649 = vmatmul.bf16.gmra.mxu0 %v565
    %v650 = vpop.f32.mrf.mxu0
    %v651 = vadd.f32 %v640, %v650
    %v652 = vpop.f32.mrf.mxu0
    %653 = vdwg.mxu0
    %v654 = vmul.f32 %v651, %v82
    %v655 = vxor.u32 %v654, 2147483648
    %v656 = vmul.f32 %v655, 1.442695
    %v657 = vpow.pop %v656
    %v658 = vadd.f32 %v657, 1.0
    %v659 = vrcp.pop %v658
    %v660 = vmul.f32 %v658, %v659
    %v661 = vsub.f32 1.0, %v660
    %v662 = vmul.f32 %v659, %v661
    %v663 = vadd.f32 %v659, %v662
    %vm664 = vweird.f32 %v658
    %vm665 = vweird.f32 %v659
    %vm666 = vmor %vm664, %vm665
    %v667 = vsel %vm666, %v659, %v663
    %v668 = vand.u32 2147483647, %v658
    %vm669 = vcmp.eq.f32.partialorder %v668, 8.507059e+37
    %v670 = vand.u32 %v658, 2147483648
    %v671 = vor.u32 1.1754944e-38, %v670
    %v672 = vsel %vm669, %v671, %v667
    %v673 = vmul.f32 1.0, %v672
    %v674 = vmul.f32 %v673, 2.0
    %v675 = vsub.f32 %v674, 1.0
    %v676 = vmul.f32 %v673, %v553
    %678 = vrot.lane.b32.xlu0 %v675, 64
    %v679 = vpop.permute.xlu0 %678
    %v681 = vmul.f32 %v673, %v679
    %683 = vrot.lane.b32.xlu0 %v681, 32
    %v684 = vpop.permute.xlu0 %683
    %v686 = vadd.f32 %v676, %v684
    %v687 = vtanh.pop %v686
    %689 = vrot.lane.b32.xlu0 %v687, 64
    %v690 = vpop.permute.xlu0 %689
    %v692 = vmul.f32 %v673, %v690
    %v693 = vpack.c.bf16 %v692, %v692
    %695 = vrot.lane.b32.xlu0 %v693, 32
    %v696 = vpop.permute.xlu0 %695
    %v698 = vsel %vm140, %v696, 0
    %700 = vmatpush.bf16.msra.mxu0 0
    %701 = vmatpush.bf16.msra.mxu0 0
    %702 = vmatpush.bf16.msra.mxu0 0
    %703 = vmatpush.bf16.msra.mxu0 0
    %704 = vmatpush.bf16.msra.mxu0 0
    %705 = vmatpush.bf16.msra.mxu0 0
    %706 = vmatpush.bf16.msra.mxu0 %v137
    %707 = vmatpush.bf16.msra.mxu0 %v136
    %708 = vmatmul.bf16.gmra.mxu0 %v698
    %v709 = vpop.f32.mrf.mxu0
    %v710 = vadd.f32 %v636, %v709
    %v711 = vpop.f32.mrf.mxu0
    %712 = vdwg.mxu0
    %v713 = vmul.f32 %v710, %v82
    %v714 = vxor.u32 %v713, 2147483648
    %v715 = vmul.f32 %v714, 1.442695
    %v716 = vpow.pop %v715
    %v717 = vadd.f32 %v716, 1.0
    %v718 = vrcp.pop %v717
    %v719 = vmul.f32 %v717, %v718
    %v720 = vsub.f32 1.0, %v719
    %v721 = vmul.f32 %v718, %v720
    %v722 = vadd.f32 %v718, %v721
    %vm723 = vweird.f32 %v717
    %vm724 = vweird.f32 %v718
    %vm725 = vmor %vm723, %vm724
    %v726 = vsel %vm725, %v718, %v722
    %v727 = vand.u32 2147483647, %v717
    %vm728 = vcmp.eq.f32.partialorder %v727, 8.507059e+37
    %v729 = vand.u32 %v717, 2147483648
    %v730 = vor.u32 1.1754944e-38, %v729
    %v731 = vsel %vm728, %v730, %v726
    %v732 = vmul.f32 1.0, %v731
    %v733 = vmul.f32 %v732, 2.0
    %v734 = vsub.f32 %v733, 1.0
    %v735 = vmul.f32 %v732, %v612
    %737 = vrot.lane.b32.xlu0 %v734, 64
    %v738 = vpop.permute.xlu0 %737
    %v740 = vmul.f32 %v732, %v738
    %742 = vrot.lane.b32.xlu0 %v740, 32
    %v743 = vpop.permute.xlu0 %742
    %v745 = vadd.f32 %v735, %v743
    %v746 = vtanh.pop %v745
    %748 = vrot.lane.b32.xlu0 %v746, 64
    %v749 = vpop.permute.xlu0 %748
    %v751 = vmul.f32 %v732, %v749
    %v752 = vpack.c.bf16 %v751, %v751
    %754 = vrot.lane.b32.xlu0 %v752, 32
    %v755 = vpop.permute.xlu0 %754
    %v757 = vsel %vm140, %v755, 0
    %759 = vmatpush.bf16.msra.mxu0 0
    %760 = vmatpush.bf16.msra.mxu0 0
    %761 = vmatpush.bf16.msra.mxu0 0
    %762 = vmatpush.bf16.msra.mxu0 0
    %763 = vmatpush.bf16.msra.mxu0 0
    %764 = vmatpush.bf16.msra.mxu0 0
    %765 = vmatpush.bf16.msra.mxu0 %v209
    %766 = vmatpush.bf16.msra.mxu0 %v208
    %767 = vmatmul.bf16.gmra.mxu0 %v757
    %v768 = vpop.f32.mrf.mxu0
    %v769 = vadd.f32 %v75, %v768
    %v770 = vpop.f32.mrf.mxu0
    %771 = vdwg.mxu0
    %s772 = scalar_lea.vmem [#allocation3], 40
    %v773 = vld [vmem:[%s772] sm:$0xff]
    %774 = vmatpush.bf16.msra.mxu0 0
    %775 = vmatpush.bf16.msra.mxu0 0
    %776 = vmatpush.bf16.msra.mxu0 0
    %777 = vmatpush.bf16.msra.mxu0 0
    %778 = vmatpush.bf16.msra.mxu0 0
    %779 = vmatpush.bf16.msra.mxu0 0
    %780 = vmatpush.bf16.msra.mxu0 %v239
    %781 = vmatpush.bf16.msra.mxu0 %v238
    %782 = vmatmul.bf16.gmra.mxu0 %v698
    %v783 = vpop.f32.mrf.mxu0
    %v784 = vadd.f32 %v773, %v783
    %v785 = vpop.f32.mrf.mxu0
    %786 = vdwg.mxu0
    %v787 = vmul.f32 %v784, %v82
    %v788 = vxor.u32 %v787, 2147483648
    %v789 = vmul.f32 %v788, 1.442695
    %v790 = vpow.pop %v789
    %v791 = vadd.f32 %v790, 1.0
    %v792 = vrcp.pop %v791
    %v793 = vmul.f32 %v791, %v792
    %v794 = vsub.f32 1.0, %v793
    %v795 = vmul.f32 %v792, %v794
    %v796 = vadd.f32 %v792, %v795
    %vm797 = vweird.f32 %v791
    %vm798 = vweird.f32 %v792
    %vm799 = vmor %vm797, %vm798
    %v800 = vsel %vm799, %v792, %v796
    %v801 = vand.u32 2147483647, %v791
    %vm802 = vcmp.eq.f32.partialorder %v801, 8.507059e+37
    %v803 = vand.u32 %v791, 2147483648
    %v804 = vor.u32 1.1754944e-38, %v803
    %v805 = vsel %vm802, %v804, %v800
    %v806 = vmul.f32 1.0, %v805
    %v807 = vmul.f32 %v806, 2.0
    %v808 = vsub.f32 %v807, 1.0
    %v809 = vmul.f32 %v806, %v686
    %811 = vrot.lane.b32.xlu0 %v808, 64
    %v812 = vpop.permute.xlu0 %811
    %v814 = vmul.f32 %v806, %v812
    %816 = vrot.lane.b32.xlu0 %v814, 32
    %v817 = vpop.permute.xlu0 %816
    %v819 = vadd.f32 %v809, %v817
    %v820 = vtanh.pop %v819
    %822 = vrot.lane.b32.xlu0 %v820, 64
    %v823 = vpop.permute.xlu0 %822
    %v825 = vmul.f32 %v806, %v823
    %v826 = vpack.c.bf16 %v825, %v825
    %828 = vrot.lane.b32.xlu0 %v826, 32
    %v829 = vpop.permute.xlu0 %828
    %v831 = vsel %vm140, %v829, 0
    %833 = vmatpush.bf16.msra.mxu0 0
    %834 = vmatpush.bf16.msra.mxu0 0
    %835 = vmatpush.bf16.msra.mxu0 0
    %836 = vmatpush.bf16.msra.mxu0 0
    %837 = vmatpush.bf16.msra.mxu0 0
    %838 = vmatpush.bf16.msra.mxu0 0
    %839 = vmatpush.bf16.msra.mxu0 %v137
    %840 = vmatpush.bf16.msra.mxu0 %v136
    %841 = vmatmul.bf16.gmra.mxu0 %v831
    %v842 = vpop.f32.mrf.mxu0
    %v843 = vadd.f32 %v769, %v842
    %v844 = vpop.f32.mrf.mxu0
    %845 = vdwg.mxu0
    %v846 = vmul.f32 %v843, %v82
    %v847 = vxor.u32 %v846, 2147483648
    %v848 = vmul.f32 %v847, 1.442695
    %v849 = vpow.pop %v848
    %v850 = vadd.f32 %v849, 1.0
    %v851 = vrcp.pop %v850
    %v852 = vmul.f32 %v850, %v851
    %v853 = vsub.f32 1.0, %v852
    %v854 = vmul.f32 %v851, %v853
    %v855 = vadd.f32 %v851, %v854
    %vm856 = vweird.f32 %v850
    %vm857 = vweird.f32 %v851
    %vm858 = vmor %vm856, %vm857
    %v859 = vsel %vm858, %v851, %v855
    %v860 = vand.u32 2147483647, %v850
    %vm861 = vcmp.eq.f32.partialorder %v860, 8.507059e+37
    %v862 = vand.u32 %v850, 2147483648
    %v863 = vor.u32 1.1754944e-38, %v862
    %v864 = vsel %vm861, %v863, %v859
    %v865 = vmul.f32 1.0, %v864
    %v866 = vmul.f32 %v865, 2.0
    %v867 = vsub.f32 %v866, 1.0
    %v868 = vmul.f32 %v865, %v745
    %870 = vrot.lane.b32.xlu0 %v867, 64
    %v871 = vpop.permute.xlu0 %870
    %v873 = vmul.f32 %v865, %v871
    %875 = vrot.lane.b32.xlu0 %v873, 32
    %v876 = vpop.permute.xlu0 %875
    %v878 = vadd.f32 %v868, %v876
    %v879 = vtanh.pop %v878
    %881 = vrot.lane.b32.xlu0 %v879, 64
    %v882 = vpop.permute.xlu0 %881
    %v884 = vmul.f32 %v865, %v882
    %v885 = vpack.c.bf16 %v884, %v884
    %887 = vrot.lane.b32.xlu0 %v885, 32
    %v888 = vpop.permute.xlu0 %887
    %v890 = vsel %vm140, %v888, 0
    %892 = vmatpush.bf16.msra.mxu0 0
    %893 = vmatpush.bf16.msra.mxu0 0
    %894 = vmatpush.bf16.msra.mxu0 0
    %895 = vmatpush.bf16.msra.mxu0 0
    %896 = vmatpush.bf16.msra.mxu0 0
    %897 = vmatpush.bf16.msra.mxu0 0
    %898 = vmatpush.bf16.msra.mxu0 %v209
    %899 = vmatpush.bf16.msra.mxu0 %v208
    %900 = vmatmul.bf16.gmra.mxu0 %v890
    %v901 = vpop.f32.mrf.mxu0
    %v902 = vadd.f32 %v75, %v901
    %v903 = vpop.f32.mrf.mxu0
    %904 = vdwg.mxu0
    %s905 = scalar_lea.vmem [#allocation3], 48
    %v906 = vld [vmem:[%s905] sm:$0xff]
    %907 = vmatpush.bf16.msra.mxu0 0
    %908 = vmatpush.bf16.msra.mxu0 0
    %909 = vmatpush.bf16.msra.mxu0 0
    %910 = vmatpush.bf16.msra.mxu0 0
    %911 = vmatpush.bf16.msra.mxu0 0
    %912 = vmatpush.bf16.msra.mxu0 0
    %913 = vmatpush.bf16.msra.mxu0 %v239
    %914 = vmatpush.bf16.msra.mxu0 %v238
    %915 = vmatmul.bf16.gmra.mxu0 %v831
    %v916 = vpop.f32.mrf.mxu0
    %v917 = vadd.f32 %v906, %v916
    %v918 = vpop.f32.mrf.mxu0
    %919 = vdwg.mxu0
    %v920 = vmul.f32 %v917, %v82
    %v921 = vxor.u32 %v920, 2147483648
    %v922 = vmul.f32 %v921, 1.442695
    %v923 = vpow.pop %v922
    %v924 = vadd.f32 %v923, 1.0
    %v925 = vrcp.pop %v924
    %v926 = vmul.f32 %v924, %v925
    %v927 = vsub.f32 1.0, %v926
    %v928 = vmul.f32 %v925, %v927
    %v929 = vadd.f32 %v925, %v928
    %vm930 = vweird.f32 %v924
    %vm931 = vweird.f32 %v925
    %vm932 = vmor %vm930, %vm931
    %v933 = vsel %vm932, %v925, %v929
    %v934 = vand.u32 2147483647, %v924
    %vm935 = vcmp.eq.f32.partialorder %v934, 8.507059e+37
    %v936 = vand.u32 %v924, 2147483648
    %v937 = vor.u32 1.1754944e-38, %v936
    %v938 = vsel %vm935, %v937, %v933
    %v939 = vmul.f32 1.0, %v938
    %v940 = vmul.f32 %v939, 2.0
    %v941 = vsub.f32 %v940, 1.0
    %v942 = vmul.f32 %v939, %v819
    %944 = vrot.lane.b32.xlu0 %v941, 64
    %v945 = vpop.permute.xlu0 %944
    %v947 = vmul.f32 %v939, %v945
    %949 = vrot.lane.b32.xlu0 %v947, 32
    %v950 = vpop.permute.xlu0 %949
    %v952 = vadd.f32 %v942, %v950
    %v953 = vtanh.pop %v952
    %955 = vrot.lane.b32.xlu0 %v953, 64
    %v956 = vpop.permute.xlu0 %955
    %v958 = vmul.f32 %v939, %v956
    %v959 = vpack.c.bf16 %v958, %v958
    %961 = vrot.lane.b32.xlu0 %v959, 32
    %v962 = vpop.permute.xlu0 %961
    %v964 = vsel %vm140, %v962, 0
    %966 = vmatpush.bf16.msra.mxu0 0
    %967 = vmatpush.bf16.msra.mxu0 0
    %968 = vmatpush.bf16.msra.mxu0 0
    %969 = vmatpush.bf16.msra.mxu0 0
    %970 = vmatpush.bf16.msra.mxu0 0
    %971 = vmatpush.bf16.msra.mxu0 0
    %972 = vmatpush.bf16.msra.mxu0 %v137
    %973 = vmatpush.bf16.msra.mxu0 %v136
    %974 = vmatmul.bf16.gmra.mxu0 %v964
    %v975 = vpop.f32.mrf.mxu0
    %v976 = vadd.f32 %v902, %v975
    %v977 = vpop.f32.mrf.mxu0
    %978 = vdwg.mxu0
    %v979 = vmul.f32 %v976, %v82
    %v980 = vxor.u32 %v979, 2147483648
    %v981 = vmul.f32 %v980, 1.442695
    %v982 = vpow.pop %v981
    %v983 = vadd.f32 %v982, 1.0
    %v984 = vrcp.pop %v983
    %v985 = vmul.f32 %v983, %v984
    %v986 = vsub.f32 1.0, %v985
    %v987 = vmul.f32 %v984, %v986
    %v988 = vadd.f32 %v984, %v987
    %vm989 = vweird.f32 %v983
    %vm990 = vweird.f32 %v984
    %vm991 = vmor %vm989, %vm990
    %v992 = vsel %vm991, %v984, %v988
    %v993 = vand.u32 2147483647, %v983
    %vm994 = vcmp.eq.f32.partialorder %v993, 8.507059e+37
    %v995 = vand.u32 %v983, 2147483648
    %v996 = vor.u32 1.1754944e-38, %v995
    %v997 = vsel %vm994, %v996, %v992
    %v998 = vmul.f32 1.0, %v997
    %v999 = vmul.f32 %v998, 2.0
    %v1000 = vsub.f32 %v999, 1.0
    %v1001 = vmul.f32 %v998, %v878
    %1003 = vrot.lane.b32.xlu0 %v1000, 64
    %v1004 = vpop.permute.xlu0 %1003
    %v1006 = vmul.f32 %v998, %v1004
    %1008 = vrot.lane.b32.xlu0 %v1006, 32
    %v1009 = vpop.permute.xlu0 %1008
    %v1011 = vadd.f32 %v1001, %v1009
    %v1012 = vtanh.pop %v1011
    %1014 = vrot.lane.b32.xlu0 %v1012, 64
    %v1015 = vpop.permute.xlu0 %1014
    %v1017 = vmul.f32 %v998, %v1015
    %v1018 = vpack.c.bf16 %v1017, %v1017
    %1020 = vrot.lane.b32.xlu0 %v1018, 32
    %v1021 = vpop.permute.xlu0 %1020
    %v1023 = vsel %vm140, %v1021, 0
    %1025 = vmatpush.bf16.msra.mxu0 0
    %1026 = vmatpush.bf16.msra.mxu0 0
    %1027 = vmatpush.bf16.msra.mxu0 0
    %1028 = vmatpush.bf16.msra.mxu0 0
    %1029 = vmatpush.bf16.msra.mxu0 0
    %1030 = vmatpush.bf16.msra.mxu0 0
    %1031 = vmatpush.bf16.msra.mxu0 %v209
    %1032 = vmatpush.bf16.msra.mxu0 %v208
    %1033 = vmatmul.bf16.gmra.mxu0 %v1023
    %v1034 = vpop.f32.mrf.mxu0
    %v1035 = vadd.f32 %v75, %v1034
    %v1036 = vpop.f32.mrf.mxu0
    %1037 = vdwg.mxu0
    %s1038 = scalar_lea.vmem [#allocation3], 56
    %v1039 = vld [vmem:[%s1038] sm:$0xff]
    %1040 = vmatpush.bf16.msra.mxu0 0
    %1041 = vmatpush.bf16.msra.mxu0 0
    %1042 = vmatpush.bf16.msra.mxu0 0
    %1043 = vmatpush.bf16.msra.mxu0 0
    %1044 = vmatpush.bf16.msra.mxu0 0
    %1045 = vmatpush.bf16.msra.mxu0 0
    %1046 = vmatpush.bf16.msra.mxu0 %v239
    %1047 = vmatpush.bf16.msra.mxu0 %v238
    %1048 = vmatmul.bf16.gmra.mxu0 %v964
    %v1049 = vpop.f32.mrf.mxu0
    %v1050 = vadd.f32 %v1039, %v1049
    %v1051 = vpop.f32.mrf.mxu0
    %1052 = vdwg.mxu0
    %v1053 = vmul.f32 %v1050, %v82
    %v1054 = vxor.u32 %v1053, 2147483648
    %v1055 = vmul.f32 %v1054, 1.442695
    %v1056 = vpow.pop %v1055
    %v1057 = vadd.f32 %v1056, 1.0
    %v1058 = vrcp.pop %v1057
    %v1059 = vmul.f32 %v1057, %v1058
    %v1060 = vsub.f32 1.0, %v1059
    %v1061 = vmul.f32 %v1058, %v1060
    %v1062 = vadd.f32 %v1058, %v1061
    %vm1063 = vweird.f32 %v1057
    %vm1064 = vweird.f32 %v1058
    %vm1065 = vmor %vm1063, %vm1064
    %v1066 = vsel %vm1065, %v1058, %v1062
    %v1067 = vand.u32 2147483647, %v1057
    %vm1068 = vcmp.eq.f32.partialorder %v1067, 8.507059e+37
    %v1069 = vand.u32 %v1057, 2147483648
    %v1070 = vor.u32 1.1754944e-38, %v1069
    %v1071 = vsel %vm1068, %v1070, %v1066
    %v1072 = vmul.f32 1.0, %v1071
    %v1073 = vmul.f32 %v1072, 2.0
    %v1074 = vsub.f32 %v1073, 1.0
    %v1075 = vmul.f32 %v1072, %v952
    %1077 = vrot.lane.b32.xlu0 %v1074, 64
    %v1078 = vpop.permute.xlu0 %1077
    %v1080 = vmul.f32 %v1072, %v1078
    %1082 = vrot.lane.b32.xlu0 %v1080, 32
    %v1083 = vpop.permute.xlu0 %1082
    %v1085 = vadd.f32 %v1075, %v1083
    %v1086 = vtanh.pop %v1085
    %1088 = vrot.lane.b32.xlu0 %v1086, 64
    %v1089 = vpop.permute.xlu0 %1088
    %v1091 = vmul.f32 %v1072, %v1089
    %v1092 = vpack.c.bf16 %v1091, %v1091
    %1094 = vrot.lane.b32.xlu0 %v1092, 32
    %v1095 = vpop.permute.xlu0 %1094
    %v1097 = vsel %vm140, %v1095, 0
    %1099 = vmatpush.bf16.msra.mxu0 0
    %1100 = vmatpush.bf16.msra.mxu0 0
    %1101 = vmatpush.bf16.msra.mxu0 0
    %1102 = vmatpush.bf16.msra.mxu0 0
    %1103 = vmatpush.bf16.msra.mxu0 0
    %1104 = vmatpush.bf16.msra.mxu0 0
    %1105 = vmatpush.bf16.msra.mxu0 %v137
    %1106 = vmatpush.bf16.msra.mxu0 %v136
    %1107 = vmatmul.bf16.gmra.mxu0 %v1097
    %v1108 = vpop.f32.mrf.mxu0
    %v1109 = vadd.f32 %v1035, %v1108
    %v1110 = vpop.f32.mrf.mxu0
    %1111 = vdwg.mxu0
    %v1112 = vmul.f32 %v1109, %v82
    %v1113 = vxor.u32 %v1112, 2147483648
    %v1114 = vmul.f32 %v1113, 1.442695
    %v1115 = vpow.pop %v1114
    %v1116 = vadd.f32 %v1115, 1.0
    %v1117 = vrcp.pop %v1116
    %v1118 = vmul.f32 %v1116, %v1117
    %v1119 = vsub.f32 1.0, %v1118
    %v1120 = vmul.f32 %v1117, %v1119
    %v1121 = vadd.f32 %v1117, %v1120
    %vm1122 = vweird.f32 %v1116
    %vm1123 = vweird.f32 %v1117
    %vm1124 = vmor %vm1122, %vm1123
    %v1125 = vsel %vm1124, %v1117, %v1121
    %v1126 = vand.u32 2147483647, %v1116
    %vm1127 = vcmp.eq.f32.partialorder %v1126, 8.507059e+37
    %v1128 = vand.u32 %v1116, 2147483648
    %v1129 = vor.u32 1.1754944e-38, %v1128
    %v1130 = vsel %vm1127, %v1129, %v1125
    %v1131 = vmul.f32 1.0, %v1130
    %v1132 = vmul.f32 %v1131, 2.0
    %v1133 = vsub.f32 %v1132, 1.0
    %v1134 = vmul.f32 %v1131, %v1011
    %1136 = vrot.lane.b32.xlu0 %v1133, 64
    %v1137 = vpop.permute.xlu0 %1136
    %v1139 = vmul.f32 %v1131, %v1137
    %1141 = vrot.lane.b32.xlu0 %v1139, 32
    %v1142 = vpop.permute.xlu0 %1141
    %v1144 = vadd.f32 %v1134, %v1142
    %v1145 = vtanh.pop %v1144
    %1147 = vrot.lane.b32.xlu0 %v1145, 64
    %v1148 = vpop.permute.xlu0 %1147
    %v1150 = vmul.f32 %v1131, %v1148
    %v1151 = vld [vmem:[%s5] sm:$0xff]
    %v1152 = vld [vmem:[%s5 + $0x8] sm:$0xff]
    %v1153 = vld [vmem:[%s5 + $0x10] sm:$0xff]
    %v1154 = vld [vmem:[%s5 + $0x18] sm:$0xff]
    %v1155 = vld [vmem:[#allocation2] sm:$0x1]
    %v1157 = vperm.slane %v1155, 0
    %1160 = vrot.lane.b32.xlu0 %v1150, 32
    %v1161 = vpop.permute.xlu0 %1160
    %v1162 = vsel %vm140, %v1161, 0
    %1164 = vmatpush.msra.mxu0 0.0
    %1165 = vmatpush.msra.mxu0 0.0
    %1166 = vmatpush.msra.mxu0 0.0
    %1167 = vmatpush.msra.mxu0 0.0
    %1168 = vmatpush.msra.mxu0 0.0
    %1169 = vmatpush.msra.mxu0 0.0
    %1170 = vmatpush.msra.mxu0 0.0
    %1171 = vmatpush.msra.mxu0 0.0
    %1172 = vmatpush.msra.mxu0 0.0
    %1173 = vmatpush.msra.mxu0 0.0
    %1174 = vmatpush.msra.mxu0 0.0
    %1175 = vmatpush.msra.mxu0 0.0
    %1176 = vmatpush.msra.mxu0 %v1154
    %1177 = vmatpush.msra.mxu0 %v1153
    %1178 = vmatpush.msra.mxu0 %v1152
    %1179 = vmatpush.msra.mxu0 %v1151
    %1180 = vmatmul.f32.gmra.mxu0 %v1162
    %v1181 = vpop.f32.mrf.mxu0
    %v1182 = vadd.f32 %v1157, %v1181
    %1183 = vdwg.mxu0
    %vm1184 = vcmask 7168
    %1185 = vst.msk [vmem:[%s7] sm:$0xff] %vm1184, %v1182
    // Predicated region
    $region38: #{tpu_custom_call.1} parent=1 // pred_check
      _
    $region39: #{tpu_custom_call.1} parent=1 // pred_check_branch
      %1187 = sbr.rel (0) target = $region41
    $region40: #{tpu_custom_call.1} parent=1 // pred_region
      _
    $region41: #{tpu_custom_call.1} parent=1 // pred_fallthru
      _
    // Predicated region
    $region42: #{tpu_custom_call.1} parent=1 // pred_check
      _
    $region43: #{tpu_custom_call.1} parent=1 // pred_check_branch
      %1189 = sbr.rel (0) target = $region45
    $region44: #{tpu_custom_call.1} parent=1 // pred_region
      _
    $region45: #{tpu_custom_call.1} parent=1 // pred_fallthru
      _
    %1190 = vsyncpa [#allocation4], 1
    %1191 = vsyncpa [#allocation6], 1

</llo_original>
